<compile_context>
chip_gen: v7x
topology: tpu7x:2x2x1
jax: 0.10.0
libtpu: 0.0.40
codegen_flags: <defaults>
</compile_context>

<pallas_src>
import functools

import jax
import jax.numpy as jnp
from jax.experimental import pallas as pl
from jax.experimental.pallas import tpu as pltpu

EPS = 1e-5


def _relu_conv1x1_bn_kernel(x_ref, w_ref, gamma_ref, beta_ref, o_ref, *, inv_m):
    # x_ref:     (Cin, M)        f32   (full array, resident across grid iters)
    # w_ref:     (Cout_blk, Cin) f32
    # gamma_ref: (Cout_blk, 1)   f32
    # beta_ref:  (Cout_blk, 1)   f32
    # o_ref:     (Cout_blk, M)   f32
    x = jnp.maximum(x_ref[...], 0.0)                                   # ReLU (VPU)
    # (Cout_blk, Cin) @ (Cin, M) -> (Cout_blk, M)  on the MXU
    y = jnp.dot(w_ref[...], x, preferred_element_type=jnp.float32)

    # One-pass per-channel (per-row) statistics over the lane axis (M).
    s1 = jnp.sum(y, axis=-1, keepdims=True)                            # (Cout_blk, 1)
    s2 = jnp.sum(y * y, axis=-1, keepdims=True)                        # (Cout_blk, 1)
    mean = s1 * inv_m
    var = s2 * inv_m - mean * mean                                     # biased var (training BN)
    inv_std = jax.lax.rsqrt(var + EPS)

    scale = gamma_ref[...] * inv_std                                   # (Cout_blk, 1)
    shift = beta_ref[...] - mean * scale                               # (Cout_blk, 1)
    o_ref[...] = y * scale + shift                                     # single FMA pass


def relu_conv1x1_bn(x_nchw, weight_oihw, gamma, beta):
    """x_nchw: (N, Cin, H, W); weight_oihw: (Cout, Cin, 1, 1); gamma/beta: (Cout,)."""
    n, cin, h, w = x_nchw.shape
    cout = weight_oihw.shape[0]
    m = n * h * w

    if n == 1:
        # Free reshape: NCHW with N=1 is already channel-major over the flat spatial dim.
        x2d = x_nchw.reshape(cin, m).astype(jnp.float32)
    else:
        # TODO(synk): for N>1 a (N,Cin,HW)->(Cin,N*HW) transpose is unavoidable in NCHW.
        x2d = jnp.transpose(x_nchw.reshape(n, cin, h * w), (1, 0, 2)).reshape(cin, m)
        x2d = x2d.astype(jnp.float32)

    w2d = weight_oihw.reshape(cout, cin).astype(jnp.float32)           # free, no transpose
    g2d = gamma.reshape(cout, 1).astype(jnp.float32)
    b2d = beta.reshape(cout, 1).astype(jnp.float32)

    # Split Cout across a 2-point parallel grid (both TCs on v7x); fall back to 1.
    n_blocks = 2 if (cout % 2 == 0 and (cout // 2) % 8 == 0) else 1
    cb = cout // n_blocks

    kernel = functools.partial(_relu_conv1x1_bn_kernel, inv_m=1.0 / float(m))

    out2d = pl.pallas_call(
        kernel,
        out_shape=jax.ShapeDtypeStruct((cout, m), jnp.float32),
        grid=(n_blocks,),
        in_specs=[
            pl.BlockSpec((cin, m), lambda i: (0, 0)),    # x: resident, same block each iter
            pl.BlockSpec((cb, cin), lambda i: (i, 0)),   # weight rows for this Cout block
            pl.BlockSpec((cb, 1), lambda i: (i, 0)),     # gamma
            pl.BlockSpec((cb, 1), lambda i: (i, 0)),     # beta
        ],
        out_specs=pl.BlockSpec((cb, m), lambda i: (i, 0)),
        compiler_params=pltpu.CompilerParams(
            dimension_semantics=("parallel",),
        ),
        cost_estimate=pl.CostEstimate(
            flops=2 * m * cin * cout,
            transcendentals=cout,
            bytes_accessed=4 * (cin * m + cout * cin + 2 * cout + cout * m),
        ),
    )(x2d, w2d, g2d, b2d)

    if n == 1:
        return out2d.reshape(1, cout, h, w)              # free reshape
    return jnp.transpose(out2d.reshape(cout, n, h * w), (1, 0, 2)).reshape(n, cout, h, w)


def _reference(x_nchw, weight_oihw, gamma, beta):
    """Pure-JAX reference mirroring PyTorch semantics (training-mode BN)."""
    x = jnp.maximum(x_nchw, 0.0)
    n, cin, h, w = x.shape
    cout = weight_oihw.shape[0]
    x2d = jnp.transpose(x, (0, 2, 3, 1)).reshape(-1, cin)
    y2d = x2d @ weight_oihw.reshape(cout, cin).T
    y = jnp.transpose(y2d.reshape(n, h, w, cout), (0, 3, 1, 2))
    mean = jnp.mean(y, axis=(0, 2, 3), keepdims=True)
    var = jnp.mean((y - mean) ** 2, axis=(0, 2, 3), keepdims=True)
    yhat = (y - mean) / jnp.sqrt(var + EPS)
    return yhat * gamma.reshape(1, cout, 1, 1) + beta.reshape(1, cout, 1, 1)


if __name__ == "__main__":
    key = jax.random.PRNGKey(0)
    kx, kw = jax.random.split(key)

    # Module shapes: Conv2d(1024 -> 256, 1x1), input (1, 1024, 14, 14).
    N, CIN, H, W = 1, 1024, 14, 14
    COUT = 256

    x = jax.random.normal(kx, (N, CIN, H, W), dtype=jnp.float32)
    # Deterministic conv weight init (kaiming-uniform-like scale for 1x1 conv).
    bound = 1.0 / jnp.sqrt(jnp.float32(CIN))
    weight = jax.random.uniform(kw, (COUT, CIN, 1, 1), dtype=jnp.float32,
                                minval=-bound, maxval=bound)
    gamma = jnp.ones((COUT,), dtype=jnp.float32)   # BatchNorm affine weight init
    beta = jnp.zeros((COUT,), dtype=jnp.float32)   # BatchNorm affine bias init

    out = relu_conv1x1_bn(x, weight, gamma, beta)
    out = jax.block_until_ready(out)

    ref = _reference(x, weight, gamma, beta)
    assert out.shape == (N, COUT, H, W)
    assert jnp.allclose(out, ref, atol=1e-3, rtol=1e-3)

    print("KERNEL_OK")
</pallas_src>

<mosaic_0001>
module attributes {stable_mosaic.version = 11 : i64} {
  func.func @_relu_conv1x1_bn_kernel(%arg0: i32, %arg1: memref<1024x196xf32, #tpu.memory_space<vmem>>, %arg2: memref<128x1024xf32, #tpu.memory_space<vmem>>, %arg3: memref<128x1xf32, #tpu.memory_space<vmem>>, %arg4: memref<128x1xf32, #tpu.memory_space<vmem>>, %arg5: memref<128x196xf32, #tpu.memory_space<vmem>>) attributes {dimension_semantics = [#tpu.dimension_semantics<parallel>], iteration_bounds = array<i64: 2>, scalar_prefetch = 0 : i64, scratch_operands = 0 : i64, tpu.core_type = #tpu.core_type<tc>, window_params = [{pipeline_mode = #tpu.pipeline_mode<synchronous>, transform_indices = @transform_0, window_bounds = array<i64: 1024, 196>}, {transform_indices = @transform_1, window_bounds = array<i64: 128, 1024>}, {transform_indices = @transform_2, window_bounds = array<i64: 128, 1>}, {transform_indices = @transform_3, window_bounds = array<i64: 128, 1>}, {transform_indices = @transform_4, window_bounds = array<i64: 128, 196>}]} {
    %c0 = arith.constant 0 : index
    %c0_0 = arith.constant 0 : index
    %0 = vector.load %arg1[%c0, %c0_0] : memref<1024x196xf32, #tpu.memory_space<vmem>>, vector<1024x196xf32>
    %cst = arith.constant 0.000000e+00 : f32
    %1 = vector.broadcast %cst : f32 to vector<1024x196xf32>
    %2 = arith.maximumf %0, %1 : vector<1024x196xf32>
    %c0_1 = arith.constant 0 : index
    %c0_2 = arith.constant 0 : index
    %3 = vector.load %arg2[%c0_1, %c0_2] : memref<128x1024xf32, #tpu.memory_space<vmem>>, vector<128x1024xf32>
    %cst_3 = arith.constant dense<0.000000e+00> : vector<128x196xf32>
    %4 = tpu.matmul %3, %2, %cst_3 {dimension_numbers = #tpu.dot_dimension_numbers<[1], [0], [0], [1], [0, 0, 1, 1], [], []>} : vector<128x1024xf32>, vector<1024x196xf32>, vector<128x196xf32> -> vector<128x196xf32>
    %cst_4 = arith.constant dense<0.000000e+00> : vector<128xf32>
    %5 = vector.multi_reduction <add>, %4, %cst_4 [1] : vector<128x196xf32> to vector<128xf32>
    %6 = vector.shape_cast %5 : vector<128xf32> to vector<128x1xf32>
    %7 = arith.mulf %4, %4 : vector<128x196xf32>
    %cst_5 = arith.constant dense<0.000000e+00> : vector<128xf32>
    %8 = vector.multi_reduction <add>, %7, %cst_5 [1] : vector<128x196xf32> to vector<128xf32>
    %9 = vector.shape_cast %8 : vector<128xf32> to vector<128x1xf32>
    %cst_6 = arith.constant 0.00510204071 : f32
    %10 = vector.broadcast %cst_6 : f32 to vector<128x1xf32>
    %11 = arith.mulf %6, %10 : vector<128x1xf32>
    %cst_7 = arith.constant 0.00510204071 : f32
    %12 = vector.broadcast %cst_7 : f32 to vector<128x1xf32>
    %13 = arith.mulf %9, %12 : vector<128x1xf32>
    %14 = arith.mulf %11, %11 : vector<128x1xf32>
    %15 = arith.subf %13, %14 : vector<128x1xf32>
    %cst_8 = arith.constant 9.99999974E-6 : f32
    %16 = vector.broadcast %cst_8 : f32 to vector<128x1xf32>
    %17 = arith.addf %15, %16 : vector<128x1xf32>
    %18 = math.rsqrt %17 : vector<128x1xf32>
    %c0_9 = arith.constant 0 : index
    %c0_10 = arith.constant 0 : index
    %19 = vector.load %arg3[%c0_9, %c0_10] : memref<128x1xf32, #tpu.memory_space<vmem>>, vector<128x1xf32>
    %20 = arith.mulf %19, %18 : vector<128x1xf32>
    %c0_11 = arith.constant 0 : index
    %c0_12 = arith.constant 0 : index
    %21 = vector.load %arg4[%c0_11, %c0_12] : memref<128x1xf32, #tpu.memory_space<vmem>>, vector<128x1xf32>
    %22 = arith.mulf %11, %20 : vector<128x1xf32>
    %23 = arith.subf %21, %22 : vector<128x1xf32>
    %24 = vector.broadcast %20 : vector<128x1xf32> to vector<128x196xf32>
    %25 = arith.mulf %4, %24 : vector<128x196xf32>
    %26 = vector.broadcast %23 : vector<128x1xf32> to vector<128x196xf32>
    %27 = arith.addf %25, %26 : vector<128x196xf32>
    %c0_13 = arith.constant 0 : index
    %c0_14 = arith.constant 0 : index
    %28 = vector.load %arg5[%c0_13, %c0_14] : memref<128x196xf32, #tpu.memory_space<vmem>>, vector<128x196xf32>
    tpu.vector_store %arg5[%c0_13, %c0_14], %27 {strides = array<i32>} : memref<128x196xf32, #tpu.memory_space<vmem>>, vector<128x196xf32>,
    return
  }
  func.func @transform_0(%arg0: i32) -> (i32, i32) {
    %c0_i32 = arith.constant 0 : i32
    %c0_i32_0 = arith.constant 0 : i32
    %c0_i32_1 = arith.constant 0 : i32
    return %c0_i32, %c0_i32_0 : i32, i32
  }
  func.func @transform_1(%arg0: i32) -> (i32, i32) {
    %c0_i32 = arith.constant 0 : i32
    %c0_i32_0 = arith.constant 0 : i32
    return %arg0, %c0_i32 : i32, i32
  }
  func.func @transform_2(%arg0: i32) -> (i32, i32) {
    %c0_i32 = arith.constant 0 : i32
    %c0_i32_0 = arith.constant 0 : i32
    return %arg0, %c0_i32 : i32, i32
  }
  func.func @transform_3(%arg0: i32) -> (i32, i32) {
    %c0_i32 = arith.constant 0 : i32
    %c0_i32_0 = arith.constant 0 : i32
    return %arg0, %c0_i32 : i32, i32
  }
  func.func @transform_4(%arg0: i32) -> (i32, i32) {
    %c0_i32 = arith.constant 0 : i32
    %c0_i32_0 = arith.constant 0 : i32
    return %arg0, %c0_i32 : i32, i32
  }
}

</mosaic_0001>

<llo_original>
// kernel: tpu_custom_call.1
$region0: #{tpu_custom_call.1}
  #allocation0 [shape = 'u32[]', space=smem, size = 0x4, offset = 0x4, fixed_abs, tag = 'smem constant byte address 0x4 - core index']
  #allocation1 [shape = 'u32[144,128]{1,0:T(1,128)}', space=vmem, size = 0x12000, scoped, tag = 'internal scratch']
  %s0 = inlined_call_operand.vmem [shape: f32[1024,196], index: 0, kind: input, shape index: {}]
  %s1 = inlined_call_operand.vmem [shape: f32[256,1024], index: 1, kind: input, shape index: {}]
  %s2 = inlined_call_operand.vmem [shape: f32[256,1], index: 2, kind: input, shape index: {}]
  %s3 = inlined_call_operand.vmem [shape: f32[256,1], index: 3, kind: input, shape index: {}]
  %s4 = inlined_call_operand.vmem [shape: f32[256,196], index: 4, kind: output, shape index: {}]
  %s5 = sld [smem:[#allocation0]]
  $region49: #{tpu_custom_call.1} parent=0
    _
  %s7 = ssub.s32 1, %s5
  %s8 = scalar_select 0, %s7, %s5
  loop: start=0, step=1, limit=4
  $region2: #{tpu_custom_call.1} parent=0 // loop_pre_header
    _
  $region3: #{tpu_custom_call.1} parent=0 // loop_header
    %s10 = sphi 0, %s14
    %p11 = scmp.ge.s32.totalorder %s10, 4
    %s18 = sphi 0, %s18
    %s20 = sphi 0, %s18
    %s21 = sphi 0, %s20
    %s35 = sphi 0, %s21
    %s41 = sphi 0, %s43
    %s44 = sphi 0, %s41
    %s45 = sphi 0, %s44
    %s61 = sphi 0, %s45
    %s67 = sphi 0, %s69
    %s70 = sphi 0, %s67
    %s71 = sphi 0, %s70
    %s87 = sphi 0, %s71
    %s93 = sphi 0, %s95
    %s96 = sphi 0, %s93
    %s97 = sphi 0, %s96
    %s113 = sphi 0, %s97
    %s119 = sphi 0, %s121
    %s122 = sphi 0, %s119
    %s123 = sphi 0, %s122
    %s139 = sphi 0, %s123
  $region4: #{tpu_custom_call.1} parent=0 // loop_header_branch
    %13 = sbr.rel (%p11) target = $region8
  $region5: #{tpu_custom_call.1} parent=0 // loop_body
    %s15 = ssub.s32 %s10, 1
    %s16 = ssub.s32 %s10, 2
    %s17 = sadd.s32 %s10, 1
    %s19 = sadd.s32 %s18, 1
    %p22 = scmp.eq.s32.totalorder %s10, 1
    %p23 = scmp.ne.s32.totalorder %s18, %s20
    %p24 = scmp.eq.s32.totalorder %s10, 0
    %p25 = por %p23, %p24
    %p26 = scmp.ne.s32.totalorder %s18, %s20
    %p27 = scmp.eq.s32.totalorder %s15, 1
    %p28 = por %p26, %p27
    %p29 = scmp.ne.s32.totalorder %s20, %s21
    %p30 = scmp.eq.s32.totalorder %s15, 0
    %p31 = por %p29, %p30
    %p32 = scmp.ne.s32.totalorder %s20, %s21
    %p33 = scmp.eq.s32.totalorder %s16, 1
    %p34 = por %p32, %p33
    %p36 = scmp.ne.s32.totalorder %s21, %s35
    %p37 = scmp.eq.s32.totalorder %s16, 0
    %p38 = por %p36, %p37
    %s39 = ssub.s32 %s10, %s17
    %p40 = scmp.eq.s32.totalorder %s39, 0
    %s42 = sadd.s32 %s41, 1
    %s43 = scalar_select %p40, %s41, %s42
    %p46 = pneg %p40
    %p47 = scmp.eq.s32.totalorder %s10, 1
    %p48 = por %p46, %p47
    %p49 = scmp.ne.s32.totalorder %s41, %s44
    %p50 = scmp.eq.s32.totalorder %s10, 0
    %p51 = por %p49, %p50
    %p52 = scmp.ne.s32.totalorder %s41, %s44
    %p53 = scmp.eq.s32.totalorder %s15, 1
    %p54 = por %p52, %p53
    %p55 = scmp.ne.s32.totalorder %s44, %s45
    %p56 = scmp.eq.s32.totalorder %s15, 0
    %p57 = por %p55, %p56
    %p58 = scmp.ne.s32.totalorder %s44, %s45
    %p59 = scmp.eq.s32.totalorder %s16, 1
    %p60 = por %p58, %p59
    %p62 = scmp.ne.s32.totalorder %s45, %s61
    %p63 = scmp.eq.s32.totalorder %s16, 0
    %p64 = por %p62, %p63
    %s65 = ssub.s32 %s10, %s17
    %p66 = scmp.eq.s32.totalorder %s65, 0
    %s68 = sadd.s32 %s67, 1
    %s69 = scalar_select %p66, %s67, %s68
    %p72 = pneg %p66
    %p73 = scmp.eq.s32.totalorder %s10, 1
    %p74 = por %p72, %p73
    %p75 = scmp.ne.s32.totalorder %s67, %s70
    %p76 = scmp.eq.s32.totalorder %s10, 0
    %p77 = por %p75, %p76
    %p78 = scmp.ne.s32.totalorder %s67, %s70
    %p79 = scmp.eq.s32.totalorder %s15, 1
    %p80 = por %p78, %p79
    %p81 = scmp.ne.s32.totalorder %s70, %s71
    %p82 = scmp.eq.s32.totalorder %s15, 0
    %p83 = por %p81, %p82
    %p84 = scmp.ne.s32.totalorder %s70, %s71
    %p85 = scmp.eq.s32.totalorder %s16, 1
    %p86 = por %p84, %p85
    %p88 = scmp.ne.s32.totalorder %s71, %s87
    %p89 = scmp.eq.s32.totalorder %s16, 0
    %p90 = por %p88, %p89
    %s91 = ssub.s32 %s10, %s17
    %p92 = scmp.eq.s32.totalorder %s91, 0
    %s94 = sadd.s32 %s93, 1
    %s95 = scalar_select %p92, %s93, %s94
    %p98 = pneg %p92
    %p99 = scmp.eq.s32.totalorder %s10, 1
    %p100 = por %p98, %p99
    %p101 = scmp.ne.s32.totalorder %s93, %s96
    %p102 = scmp.eq.s32.totalorder %s10, 0
    %p103 = por %p101, %p102
    %p104 = scmp.ne.s32.totalorder %s93, %s96
    %p105 = scmp.eq.s32.totalorder %s15, 1
    %p106 = por %p104, %p105
    %p107 = scmp.ne.s32.totalorder %s96, %s97
    %p108 = scmp.eq.s32.totalorder %s15, 0
    %p109 = por %p107, %p108
    %p110 = scmp.ne.s32.totalorder %s96, %s97
    %p111 = scmp.eq.s32.totalorder %s16, 1
    %p112 = por %p110, %p111
    %p114 = scmp.ne.s32.totalorder %s97, %s113
    %p115 = scmp.eq.s32.totalorder %s16, 0
    %p116 = por %p114, %p115
    %s117 = ssub.s32 %s10, %s17
    %p118 = scmp.eq.s32.totalorder %s117, 0
    %s120 = sadd.s32 %s119, 1
    %s121 = scalar_select %p118, %s119, %s120
    %p124 = pneg %p118
    %p125 = scmp.eq.s32.totalorder %s10, 1
    %p126 = por %p124, %p125
    %p127 = scmp.ne.s32.totalorder %s119, %s122
    %p128 = scmp.eq.s32.totalorder %s10, 0
    %p129 = por %p127, %p128
    %p130 = scmp.ne.s32.totalorder %s119, %s122
    %p131 = scmp.eq.s32.totalorder %s15, 1
    %p132 = por %p130, %p131
    %p133 = scmp.ne.s32.totalorder %s122, %s123
    %p134 = scmp.eq.s32.totalorder %s15, 0
    %p135 = por %p133, %p134
    %p136 = scmp.ne.s32.totalorder %s122, %s123
    %p137 = scmp.eq.s32.totalorder %s16, 1
    %p138 = por %p136, %p137
    %p140 = scmp.ne.s32.totalorder %s123, %s139
    %p141 = scmp.eq.s32.totalorder %s16, 0
    %p142 = por %p140, %p141
    %p143 = scmp.le.s32.totalorder 1, %s10
    %p144 = scmp.lt.s32.totalorder %s10, 3
    %p145 = pnand %p143, %p144
    %p146 = pneg %p145
    // Predicated region
    $region9: #{tpu_custom_call.1} parent=5 // pred_check
      _
    $region10: #{tpu_custom_call.1} parent=5 // pred_check_branch
      %148 = sbr.rel (%p145) target = $region12
    $region11: #{tpu_custom_call.1} parent=5 // pred_region
      %s149 = ssub.s32 %s10, 1
      // Predicated region
      $region13: #{tpu_custom_call.1} parent=11 // pred_check
        %p150 = pneg %p31
      $region14: #{tpu_custom_call.1} parent=11 // pred_check_branch
        %152 = sbr.rel (%p150) target = $region16
      $region15: #{tpu_custom_call.1} parent=11 // pred_region
        _
      $region16: #{tpu_custom_call.1} parent=11 // pred_fallthru
        _
    $region12: #{tpu_custom_call.1} parent=5 // pred_fallthru
      _
    %p153 = scmp.lt.s32.totalorder %s10, 2
    // Predicated region
    $region17: #{tpu_custom_call.1} parent=5 // pred_check
      %p154 = pneg %p153
    $region18: #{tpu_custom_call.1} parent=5 // pred_check_branch
      %156 = sbr.rel (%p154) target = $region20
    $region19: #{tpu_custom_call.1} parent=5 // pred_region
      // Predicated region
      $region21: #{tpu_custom_call.1} parent=19 // pred_check
        %p157 = pneg %p51
      $region22: #{tpu_custom_call.1} parent=19 // pred_check_branch
        %159 = sbr.rel (%p157) target = $region24
      $region23: #{tpu_custom_call.1} parent=19 // pred_region
        %s160 = smul.u32 16, %s10
        %p161 = scmp.lt.s32.totalorder %s160, 31
        %s162 = scalar_select %p161, %s160, 31
        %s163 = smul.addr %s162, 8
        %s164 = smul.addr %s163, 8
        %s165 = scalar_lea.vmem %s1, %s164
        %s166 = smul.u32 16, %s10
      $region24: #{tpu_custom_call.1} parent=19 // pred_fallthru
        _
      // Predicated region
      $region25: #{tpu_custom_call.1} parent=19 // pred_check
        %p167 = pneg %p77
      $region26: #{tpu_custom_call.1} parent=19 // pred_check_branch
        %169 = sbr.rel (%p167) target = $region28
      $region27: #{tpu_custom_call.1} parent=19 // pred_region
        %s170 = smul.u32 16, %s10
        %p171 = scmp.lt.s32.totalorder %s170, 31
        %s172 = scalar_select %p171, %s170, 31
        %s173 = smul.addr %s172, 8
        %s174 = scalar_lea.vmem %s2, %s173
        %s175 = smul.u32 16, %s10
      $region28: #{tpu_custom_call.1} parent=19 // pred_fallthru
        _
      // Predicated region
      $region29: #{tpu_custom_call.1} parent=19 // pred_check
        %p176 = pneg %p103
      $region30: #{tpu_custom_call.1} parent=19 // pred_check_branch
        %178 = sbr.rel (%p176) target = $region32
      $region31: #{tpu_custom_call.1} parent=19 // pred_region
        %s179 = smul.u32 16, %s10
        %p180 = scmp.lt.s32.totalorder %s179, 31
        %s181 = scalar_select %p180, %s179, 31
        %s182 = smul.addr %s181, 8
        %s183 = scalar_lea.vmem %s3, %s182
        %s184 = smul.u32 16, %s10
      $region32: #{tpu_custom_call.1} parent=19 // pred_fallthru
        _
    $region20: #{tpu_custom_call.1} parent=5 // pred_fallthru
      _
    %p185 = scmp.le.s32.totalorder 1, %s10
    %p186 = scmp.lt.s32.totalorder %s10, 3
    %p187 = pnand %p185, %p186
    %p188 = pneg %p187
    // Predicated region
    $region33: #{tpu_custom_call.1} parent=5 // pred_check
      _
    $region34: #{tpu_custom_call.1} parent=5 // pred_check_branch
      %190 = sbr.rel (%p187) target = $region36
    $region35: #{tpu_custom_call.1} parent=5 // pred_region
      %s191 = ssub.s32 %s10, 1
      %p192 = pneg %p31
      %p193 = pneg %p28
      %s194 = smul.u32 16, %s15
      %p195 = scmp.lt.s32.totalorder %s194, 31
      %s196 = scalar_select %p195, %s194, 31
      %s197 = smul.addr %s196, 8
      %s198 = smul.addr %s197, 8
      %s199 = scalar_lea.vmem %s1, %s198
      %p200 = pneg %p57
      %p201 = pneg %p54
      %s202 = smul.u32 16, %s15
      %p203 = scmp.lt.s32.totalorder %s202, 31
      %s204 = scalar_select %p203, %s202, 31
      %s205 = smul.addr %s204, 8
      %s206 = scalar_lea.vmem %s2, %s205
      %p207 = pneg %p83
      %p208 = pneg %p80
      %s209 = smul.u32 16, %s15
      %p210 = scmp.lt.s32.totalorder %s209, 31
      %s211 = scalar_select %p210, %s209, 31
      %s212 = smul.addr %s211, 8
      %s213 = scalar_lea.vmem %s3, %s212
      %p214 = pneg %p109
      %p215 = pneg %p106
      %p216 = pneg %p135
      %p217 = pneg %p132
      %s218 = smul.u32 16, %s15
      %p219 = scmp.lt.s32.totalorder %s218, 31
      %s220 = scalar_select %p219, %s218, 31
      %s221 = smul.addr %s220, 2
      %s222 = smul.addr %s221, 8
      %s223 = scalar_lea.vmem %s4, %s222
      %s224 = smul.u32 16, %s15
      %p225 = scmp.lt.s32.totalorder %s224, 31
      %s226 = scalar_select %p225, %s224, 31
      %s227 = smul.addr %s226, 8
      %s228 = smul.addr %s227, 8
      %s229 = scalar_lea.vmem %s1, %s228
      %s230 = smul.u32 16, %s15
      %s231 = smul.u32 16, %s15
      %p232 = scmp.lt.s32.totalorder %s231, 31
      %s233 = scalar_select %p232, %s231, 31
      %s234 = smul.addr %s233, 8
      %s235 = scalar_lea.vmem %s2, %s234
      %s236 = smul.u32 16, %s15
      %s237 = smul.u32 16, %s15
      %p238 = scmp.lt.s32.totalorder %s237, 31
      %s239 = scalar_select %p238, %s237, 31
      %s240 = smul.addr %s239, 8
      %s241 = scalar_lea.vmem %s3, %s240
      %s242 = smul.u32 16, %s15
      %s243 = smul.u32 16, %s15
      %p244 = scmp.lt.s32.totalorder %s243, 31
      %s245 = scalar_select %p244, %s243, 31
      %s246 = smul.addr %s245, 2
      %s247 = smul.addr %s246, 8
      %s248 = scalar_lea.vmem %s4, %s247
      %s249 = smul.u32 16, %s15
      %v250 = vld [vmem:[%s0] sm:$0xff]
      %v251 = vld [vmem:[%s0 + $0x8] sm:$0xff]
      %v252 = vld [vmem:[%s0 + $0x10] sm:$0xff]
      %v253 = vld [vmem:[%s0 + $0x18] sm:$0xff]
      %v254 = vld [vmem:[%s0 + $0x20] sm:$0xff]
      %v255 = vld [vmem:[%s0 + $0x28] sm:$0xff]
      %v256 = vld [vmem:[%s0 + $0x30] sm:$0xff]
      %v257 = vld [vmem:[%s0 + $0x38] sm:$0xff]
      %v258 = vld [vmem:[%s0 + $0x40] sm:$0xff]
      %v259 = vld [vmem:[%s0 + $0x48] sm:$0xff]
      %v260 = vld [vmem:[%s0 + $0x50] sm:$0xff]
      %v261 = vld [vmem:[%s0 + $0x58] sm:$0xff]
      %v262 = vld [vmem:[%s0 + $0x60] sm:$0xff]
      %v263 = vld [vmem:[%s0 + $0x68] sm:$0xff]
      %v264 = vld [vmem:[%s0 + $0x70] sm:$0xff]
      %v265 = vld [vmem:[%s0 + $0x78] sm:$0xff]
      %v266 = vld [vmem:[%s0 + $0x80] sm:$0xff]
      %v267 = vld [vmem:[%s0 + $0x88] sm:$0xff]
      %v268 = vld [vmem:[%s0 + $0x90] sm:$0xff]
      %v269 = vld [vmem:[%s0 + $0x98] sm:$0xff]
      %v270 = vld [vmem:[%s0 + $0xa0] sm:$0xff]
      %v271 = vld [vmem:[%s0 + $0xa8] sm:$0xff]
      %v272 = vld [vmem:[%s0 + $0xb0] sm:$0xff]
      %v273 = vld [vmem:[%s0 + $0xb8] sm:$0xff]
      %v274 = vld [vmem:[%s0 + $0xc0] sm:$0xff]
      %v275 = vld [vmem:[%s0 + $0xc8] sm:$0xff]
      %v276 = vld [vmem:[%s0 + $0xd0] sm:$0xff]
      %v277 = vld [vmem:[%s0 + $0xd8] sm:$0xff]
      %v278 = vld [vmem:[%s0 + $0xe0] sm:$0xff]
      %v279 = vld [vmem:[%s0 + $0xe8] sm:$0xff]
      %v280 = vld [vmem:[%s0 + $0xf0] sm:$0xff]
      %v281 = vld [vmem:[%s0 + $0xf8] sm:$0xff]
      %v282 = vld [vmem:[%s0 + $0x100] sm:$0xff]
      %v283 = vld [vmem:[%s0 + $0x108] sm:$0xff]
      %v284 = vld [vmem:[%s0 + $0x110] sm:$0xff]
      %v285 = vld [vmem:[%s0 + $0x118] sm:$0xff]
      %v286 = vld [vmem:[%s0 + $0x120] sm:$0xff]
      %v287 = vld [vmem:[%s0 + $0x128] sm:$0xff]
      %v288 = vld [vmem:[%s0 + $0x130] sm:$0xff]
      %v289 = vld [vmem:[%s0 + $0x138] sm:$0xff]
      %v290 = vld [vmem:[%s0 + $0x140] sm:$0xff]
      %v291 = vld [vmem:[%s0 + $0x148] sm:$0xff]
      %v292 = vld [vmem:[%s0 + $0x150] sm:$0xff]
      %v293 = vld [vmem:[%s0 + $0x158] sm:$0xff]
      %v294 = vld [vmem:[%s0 + $0x160] sm:$0xff]
      %v295 = vld [vmem:[%s0 + $0x168] sm:$0xff]
      %v296 = vld [vmem:[%s0 + $0x170] sm:$0xff]
      %v297 = vld [vmem:[%s0 + $0x178] sm:$0xff]
      %v298 = vld [vmem:[%s0 + $0x180] sm:$0xff]
      %v299 = vld [vmem:[%s0 + $0x188] sm:$0xff]
      %v300 = vld [vmem:[%s0 + $0x190] sm:$0xff]
      %v301 = vld [vmem:[%s0 + $0x198] sm:$0xff]
      %v302 = vld [vmem:[%s0 + $0x1a0] sm:$0xff]
      %v303 = vld [vmem:[%s0 + $0x1a8] sm:$0xff]
      %v304 = vld [vmem:[%s0 + $0x1b0] sm:$0xff]
      %v305 = vld [vmem:[%s0 + $0x1b8] sm:$0xff]
      %v306 = vld [vmem:[%s0 + $0x1c0] sm:$0xff]
      %v307 = vld [vmem:[%s0 + $0x1c8] sm:$0xff]
      %v308 = vld [vmem:[%s0 + $0x1d0] sm:$0xff]
      %v309 = vld [vmem:[%s0 + $0x1d8] sm:$0xff]
      %v310 = vld [vmem:[%s0 + $0x1e0] sm:$0xff]
      %v311 = vld [vmem:[%s0 + $0x1e8] sm:$0xff]
      %v312 = vld [vmem:[%s0 + $0x1f0] sm:$0xff]
      %v313 = vld [vmem:[%s0 + $0x1f8] sm:$0xff]
      %v314 = vld [vmem:[%s0 + $0x200] sm:$0xff]
      %v315 = vld [vmem:[%s0 + $0x208] sm:$0xff]
      %v316 = vld [vmem:[%s0 + $0x210] sm:$0xff]
      %v317 = vld [vmem:[%s0 + $0x218] sm:$0xff]
      %v318 = vld [vmem:[%s0 + $0x220] sm:$0xff]
      %v319 = vld [vmem:[%s0 + $0x228] sm:$0xff]
      %v320 = vld [vmem:[%s0 + $0x230] sm:$0xff]
      %v321 = vld [vmem:[%s0 + $0x238] sm:$0xff]
      %v322 = vld [vmem:[%s0 + $0x240] sm:$0xff]
      %v323 = vld [vmem:[%s0 + $0x248] sm:$0xff]
      %v324 = vld [vmem:[%s0 + $0x250] sm:$0xff]
      %v325 = vld [vmem:[%s0 + $0x258] sm:$0xff]
      %v326 = vld [vmem:[%s0 + $0x260] sm:$0xff]
      %v327 = vld [vmem:[%s0 + $0x268] sm:$0xff]
      %v328 = vld [vmem:[%s0 + $0x270] sm:$0xff]
      %v329 = vld [vmem:[%s0 + $0x278] sm:$0xff]
      %v330 = vld [vmem:[%s0 + $0x280] sm:$0xff]
      %v331 = vld [vmem:[%s0 + $0x288] sm:$0xff]
      %v332 = vld [vmem:[%s0 + $0x290] sm:$0xff]
      %v333 = vld [vmem:[%s0 + $0x298] sm:$0xff]
      %v334 = vld [vmem:[%s0 + $0x2a0] sm:$0xff]
      %v335 = vld [vmem:[%s0 + $0x2a8] sm:$0xff]
      %v336 = vld [vmem:[%s0 + $0x2b0] sm:$0xff]
      %v337 = vld [vmem:[%s0 + $0x2b8] sm:$0xff]
      %v338 = vld [vmem:[%s0 + $0x2c0] sm:$0xff]
      %v339 = vld [vmem:[%s0 + $0x2c8] sm:$0xff]
      %v340 = vld [vmem:[%s0 + $0x2d0] sm:$0xff]
      %v341 = vld [vmem:[%s0 + $0x2d8] sm:$0xff]
      %v342 = vld [vmem:[%s0 + $0x2e0] sm:$0xff]
      %v343 = vld [vmem:[%s0 + $0x2e8] sm:$0xff]
      %v344 = vld [vmem:[%s0 + $0x2f0] sm:$0xff]
      %v345 = vld [vmem:[%s0 + $0x2f8] sm:$0xff]
      %v346 = vld [vmem:[%s0 + $0x300] sm:$0xff]
      %v347 = vld [vmem:[%s0 + $0x308] sm:$0xff]
      %v348 = vld [vmem:[%s0 + $0x310] sm:$0xff]
      %v349 = vld [vmem:[%s0 + $0x318] sm:$0xff]
      %v350 = vld [vmem:[%s0 + $0x320] sm:$0xff]
      %v351 = vld [vmem:[%s0 + $0x328] sm:$0xff]
      %v352 = vld [vmem:[%s0 + $0x330] sm:$0xff]
      %v353 = vld [vmem:[%s0 + $0x338] sm:$0xff]
      %v354 = vld [vmem:[%s0 + $0x340] sm:$0xff]
      %v355 = vld [vmem:[%s0 + $0x348] sm:$0xff]
      %v356 = vld [vmem:[%s0 + $0x350] sm:$0xff]
      %v357 = vld [vmem:[%s0 + $0x358] sm:$0xff]
      %v358 = vld [vmem:[%s0 + $0x360] sm:$0xff]
      %v359 = vld [vmem:[%s0 + $0x368] sm:$0xff]
      %v360 = vld [vmem:[%s0 + $0x370] sm:$0xff]
      %v361 = vld [vmem:[%s0 + $0x378] sm:$0xff]
      %v362 = vld [vmem:[%s0 + $0x380] sm:$0xff]
      %v363 = vld [vmem:[%s0 + $0x388] sm:$0xff]
      %v364 = vld [vmem:[%s0 + $0x390] sm:$0xff]
      %v365 = vld [vmem:[%s0 + $0x398] sm:$0xff]
      %v366 = vld [vmem:[%s0 + $0x3a0] sm:$0xff]
      %v367 = vld [vmem:[%s0 + $0x3a8] sm:$0xff]
      %v368 = vld [vmem:[%s0 + $0x3b0] sm:$0xff]
      %v369 = vld [vmem:[%s0 + $0x3b8] sm:$0xff]
      %v370 = vld [vmem:[%s0 + $0x3c0] sm:$0xff]
      %v371 = vld [vmem:[%s0 + $0x3c8] sm:$0xff]
      %v372 = vld [vmem:[%s0 + $0x3d0] sm:$0xff]
      %v373 = vld [vmem:[%s0 + $0x3d8] sm:$0xff]
      %v374 = vld [vmem:[%s0 + $0x3e0] sm:$0xff]
      %v375 = vld [vmem:[%s0 + $0x3e8] sm:$0xff]
      %v376 = vld [vmem:[%s0 + $0x3f0] sm:$0xff]
      %v377 = vld [vmem:[%s0 + $0x3f8] sm:$0xff]
      %v378 = vld [vmem:[%s0 + $0x400] sm:$0xff]
      %v379 = vld [vmem:[%s0 + $0x408] sm:$0xff]
      %v380 = vld [vmem:[%s0 + $0x410] sm:$0xff]
      %v381 = vld [vmem:[%s0 + $0x418] sm:$0xff]
      %v382 = vld [vmem:[%s0 + $0x420] sm:$0xff]
      %v383 = vld [vmem:[%s0 + $0x428] sm:$0xff]
      %v384 = vld [vmem:[%s0 + $0x430] sm:$0xff]
      %v385 = vld [vmem:[%s0 + $0x438] sm:$0xff]
      %v386 = vld [vmem:[%s0 + $0x440] sm:$0xff]
      %v387 = vld [vmem:[%s0 + $0x448] sm:$0xff]
      %v388 = vld [vmem:[%s0 + $0x450] sm:$0xff]
      %v389 = vld [vmem:[%s0 + $0x458] sm:$0xff]
      %v390 = vld [vmem:[%s0 + $0x460] sm:$0xff]
      %v391 = vld [vmem:[%s0 + $0x468] sm:$0xff]
      %v392 = vld [vmem:[%s0 + $0x470] sm:$0xff]
      %v393 = vld [vmem:[%s0 + $0x478] sm:$0xff]
      %v394 = vld [vmem:[%s0 + $0x480] sm:$0xff]
      %v395 = vld [vmem:[%s0 + $0x488] sm:$0xff]
      %v396 = vld [vmem:[%s0 + $0x490] sm:$0xff]
      %v397 = vld [vmem:[%s0 + $0x498] sm:$0xff]
      %v398 = vld [vmem:[%s0 + $0x4a0] sm:$0xff]
      %v399 = vld [vmem:[%s0 + $0x4a8] sm:$0xff]
      %v400 = vld [vmem:[%s0 + $0x4b0] sm:$0xff]
      %v401 = vld [vmem:[%s0 + $0x4b8] sm:$0xff]
      %v402 = vld [vmem:[%s0 + $0x4c0] sm:$0xff]
      %v403 = vld [vmem:[%s0 + $0x4c8] sm:$0xff]
      %v404 = vld [vmem:[%s0 + $0x4d0] sm:$0xff]
      %v405 = vld [vmem:[%s0 + $0x4d8] sm:$0xff]
      %v406 = vld [vmem:[%s0 + $0x4e0] sm:$0xff]
      %v407 = vld [vmem:[%s0 + $0x4e8] sm:$0xff]
      %v408 = vld [vmem:[%s0 + $0x4f0] sm:$0xff]
      %v409 = vld [vmem:[%s0 + $0x4f8] sm:$0xff]
      %v410 = vld [vmem:[%s0 + $0x500] sm:$0xff]
      %v411 = vld [vmem:[%s0 + $0x508] sm:$0xff]
      %v412 = vld [vmem:[%s0 + $0x510] sm:$0xff]
      %v413 = vld [vmem:[%s0 + $0x518] sm:$0xff]
      %v414 = vld [vmem:[%s0 + $0x520] sm:$0xff]
      %v415 = vld [vmem:[%s0 + $0x528] sm:$0xff]
      %v416 = vld [vmem:[%s0 + $0x530] sm:$0xff]
      %v417 = vld [vmem:[%s0 + $0x538] sm:$0xff]
      %v418 = vld [vmem:[%s0 + $0x540] sm:$0xff]
      %v419 = vld [vmem:[%s0 + $0x548] sm:$0xff]
      %v420 = vld [vmem:[%s0 + $0x550] sm:$0xff]
      %v421 = vld [vmem:[%s0 + $0x558] sm:$0xff]
      %v422 = vld [vmem:[%s0 + $0x560] sm:$0xff]
      %v423 = vld [vmem:[%s0 + $0x568] sm:$0xff]
      %v424 = vld [vmem:[%s0 + $0x570] sm:$0xff]
      %v425 = vld [vmem:[%s0 + $0x578] sm:$0xff]
      %v426 = vld [vmem:[%s0 + $0x580] sm:$0xff]
      %v427 = vld [vmem:[%s0 + $0x588] sm:$0xff]
      %v428 = vld [vmem:[%s0 + $0x590] sm:$0xff]
      %v429 = vld [vmem:[%s0 + $0x598] sm:$0xff]
      %v430 = vld [vmem:[%s0 + $0x5a0] sm:$0xff]
      %v431 = vld [vmem:[%s0 + $0x5a8] sm:$0xff]
      %v432 = vld [vmem:[%s0 + $0x5b0] sm:$0xff]
      %v433 = vld [vmem:[%s0 + $0x5b8] sm:$0xff]
      %v434 = vld [vmem:[%s0 + $0x5c0] sm:$0xff]
      %v435 = vld [vmem:[%s0 + $0x5c8] sm:$0xff]
      %v436 = vld [vmem:[%s0 + $0x5d0] sm:$0xff]
      %v437 = vld [vmem:[%s0 + $0x5d8] sm:$0xff]
      %v438 = vld [vmem:[%s0 + $0x5e0] sm:$0xff]
      %v439 = vld [vmem:[%s0 + $0x5e8] sm:$0xff]
      %v440 = vld [vmem:[%s0 + $0x5f0] sm:$0xff]
      %v441 = vld [vmem:[%s0 + $0x5f8] sm:$0xff]
      %v442 = vld [vmem:[%s0 + $0x600] sm:$0xff]
      %v443 = vld [vmem:[%s0 + $0x608] sm:$0xff]
      %v444 = vld [vmem:[%s0 + $0x610] sm:$0xff]
      %v445 = vld [vmem:[%s0 + $0x618] sm:$0xff]
      %v446 = vld [vmem:[%s0 + $0x620] sm:$0xff]
      %v447 = vld [vmem:[%s0 + $0x628] sm:$0xff]
      %v448 = vld [vmem:[%s0 + $0x630] sm:$0xff]
      %v449 = vld [vmem:[%s0 + $0x638] sm:$0xff]
      %v450 = vld [vmem:[%s0 + $0x640] sm:$0xff]
      %v451 = vld [vmem:[%s0 + $0x648] sm:$0xff]
      %v452 = vld [vmem:[%s0 + $0x650] sm:$0xff]
      %v453 = vld [vmem:[%s0 + $0x658] sm:$0xff]
      %v454 = vld [vmem:[%s0 + $0x660] sm:$0xff]
      %v455 = vld [vmem:[%s0 + $0x668] sm:$0xff]
      %v456 = vld [vmem:[%s0 + $0x670] sm:$0xff]
      %v457 = vld [vmem:[%s0 + $0x678] sm:$0xff]
      %v458 = vld [vmem:[%s0 + $0x680] sm:$0xff]
      %v459 = vld [vmem:[%s0 + $0x688] sm:$0xff]
      %v460 = vld [vmem:[%s0 + $0x690] sm:$0xff]
      %v461 = vld [vmem:[%s0 + $0x698] sm:$0xff]
      %v462 = vld [vmem:[%s0 + $0x6a0] sm:$0xff]
      %v463 = vld [vmem:[%s0 + $0x6a8] sm:$0xff]
      %v464 = vld [vmem:[%s0 + $0x6b0] sm:$0xff]
      %v465 = vld [vmem:[%s0 + $0x6b8] sm:$0xff]
      %v466 = vld [vmem:[%s0 + $0x6c0] sm:$0xff]
      %v467 = vld [vmem:[%s0 + $0x6c8] sm:$0xff]
      %v468 = vld [vmem:[%s0 + $0x6d0] sm:$0xff]
      %v469 = vld [vmem:[%s0 + $0x6d8] sm:$0xff]
      %v470 = vld [vmem:[%s0 + $0x6e0] sm:$0xff]
      %v471 = vld [vmem:[%s0 + $0x6e8] sm:$0xff]
      %v472 = vld [vmem:[%s0 + $0x6f0] sm:$0xff]
      %v473 = vld [vmem:[%s0 + $0x6f8] sm:$0xff]
      %v474 = vld [vmem:[%s0 + $0x700] sm:$0xff]
      %v475 = vld [vmem:[%s0 + $0x708] sm:$0xff]
      %v476 = vld [vmem:[%s0 + $0x710] sm:$0xff]
      %v477 = vld [vmem:[%s0 + $0x718] sm:$0xff]
      %v478 = vld [vmem:[%s0 + $0x720] sm:$0xff]
      %v479 = vld [vmem:[%s0 + $0x728] sm:$0xff]
      %v480 = vld [vmem:[%s0 + $0x730] sm:$0xff]
      %v481 = vld [vmem:[%s0 + $0x738] sm:$0xff]
      %v482 = vld [vmem:[%s0 + $0x740] sm:$0xff]
      %v483 = vld [vmem:[%s0 + $0x748] sm:$0xff]
      %v484 = vld [vmem:[%s0 + $0x750] sm:$0xff]
      %v485 = vld [vmem:[%s0 + $0x758] sm:$0xff]
      %v486 = vld [vmem:[%s0 + $0x760] sm:$0xff]
      %v487 = vld [vmem:[%s0 + $0x768] sm:$0xff]
      %v488 = vld [vmem:[%s0 + $0x770] sm:$0xff]
      %v489 = vld [vmem:[%s0 + $0x778] sm:$0xff]
      %v490 = vld [vmem:[%s0 + $0x780] sm:$0xff]
      %v491 = vld [vmem:[%s0 + $0x788] sm:$0xff]
      %v492 = vld [vmem:[%s0 + $0x790] sm:$0xff]
      %v493 = vld [vmem:[%s0 + $0x798] sm:$0xff]
      %v494 = vld [vmem:[%s0 + $0x7a0] sm:$0xff]
      %v495 = vld [vmem:[%s0 + $0x7a8] sm:$0xff]
      %v496 = vld [vmem:[%s0 + $0x7b0] sm:$0xff]
      %v497 = vld [vmem:[%s0 + $0x7b8] sm:$0xff]
      %v498 = vld [vmem:[%s0 + $0x7c0] sm:$0xff]
      %v499 = vld [vmem:[%s0 + $0x7c8] sm:$0xff]
      %v500 = vld [vmem:[%s0 + $0x7d0] sm:$0xff]
      %v501 = vld [vmem:[%s0 + $0x7d8] sm:$0xff]
      %v502 = vld [vmem:[%s0 + $0x7e0] sm:$0xff]
      %v503 = vld [vmem:[%s0 + $0x7e8] sm:$0xff]
      %v504 = vld [vmem:[%s0 + $0x7f0] sm:$0xff]
      %v505 = vld [vmem:[%s0 + $0x7f8] sm:$0xff]
      %v506 = vmax.f32 %v250, 0.0
      %v507 = vmax.f32 %v251, 0.0
      %v508 = vmax.f32 %v252, 0.0
      %v509 = vmax.f32 %v253, 0.0
      %v510 = vmax.f32 %v254, 0.0
      %v511 = vmax.f32 %v255, 0.0
      %v512 = vmax.f32 %v256, 0.0
      %v513 = vmax.f32 %v257, 0.0
      %v514 = vmax.f32 %v258, 0.0
      %v515 = vmax.f32 %v259, 0.0
      %v516 = vmax.f32 %v260, 0.0
      %v517 = vmax.f32 %v261, 0.0
      %v518 = vmax.f32 %v262, 0.0
      %v519 = vmax.f32 %v263, 0.0
      %v520 = vmax.f32 %v264, 0.0
      %v521 = vmax.f32 %v265, 0.0
      %v522 = vmax.f32 %v266, 0.0
      %v523 = vmax.f32 %v267, 0.0
      %v524 = vmax.f32 %v268, 0.0
      %v525 = vmax.f32 %v269, 0.0
      %v526 = vmax.f32 %v270, 0.0
      %v527 = vmax.f32 %v271, 0.0
      %v528 = vmax.f32 %v272, 0.0
      %v529 = vmax.f32 %v273, 0.0
      %v530 = vmax.f32 %v274, 0.0
      %v531 = vmax.f32 %v275, 0.0
      %v532 = vmax.f32 %v276, 0.0
      %v533 = vmax.f32 %v277, 0.0
      %v534 = vmax.f32 %v278, 0.0
      %v535 = vmax.f32 %v279, 0.0
      %v536 = vmax.f32 %v280, 0.0
      %v537 = vmax.f32 %v281, 0.0
      %v538 = vmax.f32 %v282, 0.0
      %v539 = vmax.f32 %v283, 0.0
      %v540 = vmax.f32 %v284, 0.0
      %v541 = vmax.f32 %v285, 0.0
      %v542 = vmax.f32 %v286, 0.0
      %v543 = vmax.f32 %v287, 0.0
      %v544 = vmax.f32 %v288, 0.0
      %v545 = vmax.f32 %v289, 0.0
      %v546 = vmax.f32 %v290, 0.0
      %v547 = vmax.f32 %v291, 0.0
      %v548 = vmax.f32 %v292, 0.0
      %v549 = vmax.f32 %v293, 0.0
      %v550 = vmax.f32 %v294, 0.0
      %v551 = vmax.f32 %v295, 0.0
      %v552 = vmax.f32 %v296, 0.0
      %v553 = vmax.f32 %v297, 0.0
      %v554 = vmax.f32 %v298, 0.0
      %v555 = vmax.f32 %v299, 0.0
      %v556 = vmax.f32 %v300, 0.0
      %v557 = vmax.f32 %v301, 0.0
      %v558 = vmax.f32 %v302, 0.0
      %v559 = vmax.f32 %v303, 0.0
      %v560 = vmax.f32 %v304, 0.0
      %v561 = vmax.f32 %v305, 0.0
      %v562 = vmax.f32 %v306, 0.0
      %v563 = vmax.f32 %v307, 0.0
      %v564 = vmax.f32 %v308, 0.0
      %v565 = vmax.f32 %v309, 0.0
      %v566 = vmax.f32 %v310, 0.0
      %v567 = vmax.f32 %v311, 0.0
      %v568 = vmax.f32 %v312, 0.0
      %v569 = vmax.f32 %v313, 0.0
      %v570 = vmax.f32 %v314, 0.0
      %v571 = vmax.f32 %v315, 0.0
      %v572 = vmax.f32 %v316, 0.0
      %v573 = vmax.f32 %v317, 0.0
      %v574 = vmax.f32 %v318, 0.0
      %v575 = vmax.f32 %v319, 0.0
      %v576 = vmax.f32 %v320, 0.0
      %v577 = vmax.f32 %v321, 0.0
      %v578 = vmax.f32 %v322, 0.0
      %v579 = vmax.f32 %v323, 0.0
      %v580 = vmax.f32 %v324, 0.0
      %v581 = vmax.f32 %v325, 0.0
      %v582 = vmax.f32 %v326, 0.0
      %v583 = vmax.f32 %v327, 0.0
      %v584 = vmax.f32 %v328, 0.0
      %v585 = vmax.f32 %v329, 0.0
      %v586 = vmax.f32 %v330, 0.0
      %v587 = vmax.f32 %v331, 0.0
      %v588 = vmax.f32 %v332, 0.0
      %v589 = vmax.f32 %v333, 0.0
      %v590 = vmax.f32 %v334, 0.0
      %v591 = vmax.f32 %v335, 0.0
      %v592 = vmax.f32 %v336, 0.0
      %v593 = vmax.f32 %v337, 0.0
      %v594 = vmax.f32 %v338, 0.0
      %v595 = vmax.f32 %v339, 0.0
      %v596 = vmax.f32 %v340, 0.0
      %v597 = vmax.f32 %v341, 0.0
      %v598 = vmax.f32 %v342, 0.0
      %v599 = vmax.f32 %v343, 0.0
      %v600 = vmax.f32 %v344, 0.0
      %v601 = vmax.f32 %v345, 0.0
      %v602 = vmax.f32 %v346, 0.0
      %v603 = vmax.f32 %v347, 0.0
      %v604 = vmax.f32 %v348, 0.0
      %v605 = vmax.f32 %v349, 0.0
      %v606 = vmax.f32 %v350, 0.0
      %v607 = vmax.f32 %v351, 0.0
      %v608 = vmax.f32 %v352, 0.0
      %v609 = vmax.f32 %v353, 0.0
      %v610 = vmax.f32 %v354, 0.0
      %v611 = vmax.f32 %v355, 0.0
      %v612 = vmax.f32 %v356, 0.0
      %v613 = vmax.f32 %v357, 0.0
      %v614 = vmax.f32 %v358, 0.0
      %v615 = vmax.f32 %v359, 0.0
      %v616 = vmax.f32 %v360, 0.0
      %v617 = vmax.f32 %v361, 0.0
      %v618 = vmax.f32 %v362, 0.0
      %v619 = vmax.f32 %v363, 0.0
      %v620 = vmax.f32 %v364, 0.0
      %v621 = vmax.f32 %v365, 0.0
      %v622 = vmax.f32 %v366, 0.0
      %v623 = vmax.f32 %v367, 0.0
      %v624 = vmax.f32 %v368, 0.0
      %v625 = vmax.f32 %v369, 0.0
      %v626 = vmax.f32 %v370, 0.0
      %v627 = vmax.f32 %v371, 0.0
      %v628 = vmax.f32 %v372, 0.0
      %v629 = vmax.f32 %v373, 0.0
      %v630 = vmax.f32 %v374, 0.0
      %v631 = vmax.f32 %v375, 0.0
      %v632 = vmax.f32 %v376, 0.0
      %v633 = vmax.f32 %v377, 0.0
      %v634 = vmax.f32 %v378, 0.0
      %v635 = vmax.f32 %v379, 0.0
      %v636 = vmax.f32 %v380, 0.0
      %v637 = vmax.f32 %v381, 0.0
      %v638 = vmax.f32 %v382, 0.0
      %v639 = vmax.f32 %v383, 0.0
      %v640 = vmax.f32 %v384, 0.0
      %v641 = vmax.f32 %v385, 0.0
      %v642 = vmax.f32 %v386, 0.0
      %v643 = vmax.f32 %v387, 0.0
      %v644 = vmax.f32 %v388, 0.0
      %v645 = vmax.f32 %v389, 0.0
      %v646 = vmax.f32 %v390, 0.0
      %v647 = vmax.f32 %v391, 0.0
      %v648 = vmax.f32 %v392, 0.0
      %v649 = vmax.f32 %v393, 0.0
      %v650 = vmax.f32 %v394, 0.0
      %v651 = vmax.f32 %v395, 0.0
      %v652 = vmax.f32 %v396, 0.0
      %v653 = vmax.f32 %v397, 0.0
      %v654 = vmax.f32 %v398, 0.0
      %v655 = vmax.f32 %v399, 0.0
      %v656 = vmax.f32 %v400, 0.0
      %v657 = vmax.f32 %v401, 0.0
      %v658 = vmax.f32 %v402, 0.0
      %v659 = vmax.f32 %v403, 0.0
      %v660 = vmax.f32 %v404, 0.0
      %v661 = vmax.f32 %v405, 0.0
      %v662 = vmax.f32 %v406, 0.0
      %v663 = vmax.f32 %v407, 0.0
      %v664 = vmax.f32 %v408, 0.0
      %v665 = vmax.f32 %v409, 0.0
      %v666 = vmax.f32 %v410, 0.0
      %v667 = vmax.f32 %v411, 0.0
      %v668 = vmax.f32 %v412, 0.0
      %v669 = vmax.f32 %v413, 0.0
      %v670 = vmax.f32 %v414, 0.0
      %v671 = vmax.f32 %v415, 0.0
      %v672 = vmax.f32 %v416, 0.0
      %v673 = vmax.f32 %v417, 0.0
      %v674 = vmax.f32 %v418, 0.0
      %v675 = vmax.f32 %v419, 0.0
      %v676 = vmax.f32 %v420, 0.0
      %v677 = vmax.f32 %v421, 0.0
      %v678 = vmax.f32 %v422, 0.0
      %v679 = vmax.f32 %v423, 0.0
      %v680 = vmax.f32 %v424, 0.0
      %v681 = vmax.f32 %v425, 0.0
      %v682 = vmax.f32 %v426, 0.0
      %v683 = vmax.f32 %v427, 0.0
      %v684 = vmax.f32 %v428, 0.0
      %v685 = vmax.f32 %v429, 0.0
      %v686 = vmax.f32 %v430, 0.0
      %v687 = vmax.f32 %v431, 0.0
      %v688 = vmax.f32 %v432, 0.0
      %v689 = vmax.f32 %v433, 0.0
      %v690 = vmax.f32 %v434, 0.0
      %v691 = vmax.f32 %v435, 0.0
      %v692 = vmax.f32 %v436, 0.0
      %v693 = vmax.f32 %v437, 0.0
      %v694 = vmax.f32 %v438, 0.0
      %v695 = vmax.f32 %v439, 0.0
      %v696 = vmax.f32 %v440, 0.0
      %v697 = vmax.f32 %v441, 0.0
      %v698 = vmax.f32 %v442, 0.0
      %v699 = vmax.f32 %v443, 0.0
      %v700 = vmax.f32 %v444, 0.0
      %v701 = vmax.f32 %v445, 0.0
      %v702 = vmax.f32 %v446, 0.0
      %v703 = vmax.f32 %v447, 0.0
      %v704 = vmax.f32 %v448, 0.0
      %v705 = vmax.f32 %v449, 0.0
      %v706 = vmax.f32 %v450, 0.0
      %v707 = vmax.f32 %v451, 0.0
      %v708 = vmax.f32 %v452, 0.0
      %v709 = vmax.f32 %v453, 0.0
      %v710 = vmax.f32 %v454, 0.0
      %v711 = vmax.f32 %v455, 0.0
      %v712 = vmax.f32 %v456, 0.0
      %v713 = vmax.f32 %v457, 0.0
      %v714 = vmax.f32 %v458, 0.0
      %v715 = vmax.f32 %v459, 0.0
      %v716 = vmax.f32 %v460, 0.0
      %v717 = vmax.f32 %v461, 0.0
      %v718 = vmax.f32 %v462, 0.0
      %v719 = vmax.f32 %v463, 0.0
      %v720 = vmax.f32 %v464, 0.0
      %v721 = vmax.f32 %v465, 0.0
      %v722 = vmax.f32 %v466, 0.0
      %v723 = vmax.f32 %v467, 0.0
      %v724 = vmax.f32 %v468, 0.0
      %v725 = vmax.f32 %v469, 0.0
      %v726 = vmax.f32 %v470, 0.0
      %v727 = vmax.f32 %v471, 0.0
      %v728 = vmax.f32 %v472, 0.0
      %v729 = vmax.f32 %v473, 0.0
      %v730 = vmax.f32 %v474, 0.0
      %v731 = vmax.f32 %v475, 0.0
      %v732 = vmax.f32 %v476, 0.0
      %v733 = vmax.f32 %v477, 0.0
      %v734 = vmax.f32 %v478, 0.0
      %v735 = vmax.f32 %v479, 0.0
      %v736 = vmax.f32 %v480, 0.0
      %v737 = vmax.f32 %v481, 0.0
      %v738 = vmax.f32 %v482, 0.0
      %v739 = vmax.f32 %v483, 0.0
      %v740 = vmax.f32 %v484, 0.0
      %v741 = vmax.f32 %v485, 0.0
      %v742 = vmax.f32 %v486, 0.0
      %v743 = vmax.f32 %v487, 0.0
      %v744 = vmax.f32 %v488, 0.0
      %v745 = vmax.f32 %v489, 0.0
      %v746 = vmax.f32 %v490, 0.0
      %v747 = vmax.f32 %v491, 0.0
      %v748 = vmax.f32 %v492, 0.0
      %v749 = vmax.f32 %v493, 0.0
      %v750 = vmax.f32 %v494, 0.0
      %v751 = vmax.f32 %v495, 0.0
      %v752 = vmax.f32 %v496, 0.0
      %v753 = vmax.f32 %v497, 0.0
      %v754 = vmax.f32 %v498, 0.0
      %v755 = vmax.f32 %v499, 0.0
      %v756 = vmax.f32 %v500, 0.0
      %v757 = vmax.f32 %v501, 0.0
      %v758 = vmax.f32 %v502, 0.0
      %v759 = vmax.f32 %v503, 0.0
      %v760 = vmax.f32 %v504, 0.0
      %v761 = vmax.f32 %v505, 0.0
      %v762 = vld [vmem:[%s229] sm:$0xff]
      %v763 = vld [vmem:[%s229 + $0x8] sm:$0xff]
      %v764 = vld [vmem:[%s229 + $0x10] sm:$0xff]
      %v765 = vld [vmem:[%s229 + $0x18] sm:$0xff]
      %v766 = vld [vmem:[%s229 + $0x20] sm:$0xff]
      %v767 = vld [vmem:[%s229 + $0x28] sm:$0xff]
      %v768 = vld [vmem:[%s229 + $0x30] sm:$0xff]
      %v769 = vld [vmem:[%s229 + $0x38] sm:$0xff]
      %v770 = vld [vmem:[%s229 + $0x40] sm:$0xff]
      %v771 = vld [vmem:[%s229 + $0x48] sm:$0xff]
      %v772 = vld [vmem:[%s229 + $0x50] sm:$0xff]
      %v773 = vld [vmem:[%s229 + $0x58] sm:$0xff]
      %v774 = vld [vmem:[%s229 + $0x60] sm:$0xff]
      %v775 = vld [vmem:[%s229 + $0x68] sm:$0xff]
      %v776 = vld [vmem:[%s229 + $0x70] sm:$0xff]
      %v777 = vld [vmem:[%s229 + $0x78] sm:$0xff]
      %v778 = vld [vmem:[%s229 + $0x80] sm:$0xff]
      %v779 = vld [vmem:[%s229 + $0x88] sm:$0xff]
      %v780 = vld [vmem:[%s229 + $0x90] sm:$0xff]
      %v781 = vld [vmem:[%s229 + $0x98] sm:$0xff]
      %v782 = vld [vmem:[%s229 + $0xa0] sm:$0xff]
      %v783 = vld [vmem:[%s229 + $0xa8] sm:$0xff]
      %v784 = vld [vmem:[%s229 + $0xb0] sm:$0xff]
      %v785 = vld [vmem:[%s229 + $0xb8] sm:$0xff]
      %v786 = vld [vmem:[%s229 + $0xc0] sm:$0xff]
      %v787 = vld [vmem:[%s229 + $0xc8] sm:$0xff]
      %v788 = vld [vmem:[%s229 + $0xd0] sm:$0xff]
      %v789 = vld [vmem:[%s229 + $0xd8] sm:$0xff]
      %v790 = vld [vmem:[%s229 + $0xe0] sm:$0xff]
      %v791 = vld [vmem:[%s229 + $0xe8] sm:$0xff]
      %v792 = vld [vmem:[%s229 + $0xf0] sm:$0xff]
      %v793 = vld [vmem:[%s229 + $0xf8] sm:$0xff]
      %v794 = vld [vmem:[%s229 + $0x100] sm:$0xff]
      %v795 = vld [vmem:[%s229 + $0x108] sm:$0xff]
      %v796 = vld [vmem:[%s229 + $0x110] sm:$0xff]
      %v797 = vld [vmem:[%s229 + $0x118] sm:$0xff]
      %v798 = vld [vmem:[%s229 + $0x120] sm:$0xff]
      %v799 = vld [vmem:[%s229 + $0x128] sm:$0xff]
      %v800 = vld [vmem:[%s229 + $0x130] sm:$0xff]
      %v801 = vld [vmem:[%s229 + $0x138] sm:$0xff]
      %v802 = vld [vmem:[%s229 + $0x140] sm:$0xff]
      %v803 = vld [vmem:[%s229 + $0x148] sm:$0xff]
      %v804 = vld [vmem:[%s229 + $0x150] sm:$0xff]
      %v805 = vld [vmem:[%s229 + $0x158] sm:$0xff]
      %v806 = vld [vmem:[%s229 + $0x160] sm:$0xff]
      %v807 = vld [vmem:[%s229 + $0x168] sm:$0xff]
      %v808 = vld [vmem:[%s229 + $0x170] sm:$0xff]
      %v809 = vld [vmem:[%s229 + $0x178] sm:$0xff]
      %v810 = vld [vmem:[%s229 + $0x180] sm:$0xff]
      %v811 = vld [vmem:[%s229 + $0x188] sm:$0xff]
      %v812 = vld [vmem:[%s229 + $0x190] sm:$0xff]
      %v813 = vld [vmem:[%s229 + $0x198] sm:$0xff]
      %v814 = vld [vmem:[%s229 + $0x1a0] sm:$0xff]
      %v815 = vld [vmem:[%s229 + $0x1a8] sm:$0xff]
      %v816 = vld [vmem:[%s229 + $0x1b0] sm:$0xff]
      %v817 = vld [vmem:[%s229 + $0x1b8] sm:$0xff]
      %v818 = vld [vmem:[%s229 + $0x1c0] sm:$0xff]
      %v819 = vld [vmem:[%s229 + $0x1c8] sm:$0xff]
      %v820 = vld [vmem:[%s229 + $0x1d0] sm:$0xff]
      %v821 = vld [vmem:[%s229 + $0x1d8] sm:$0xff]
      %v822 = vld [vmem:[%s229 + $0x1e0] sm:$0xff]
      %v823 = vld [vmem:[%s229 + $0x1e8] sm:$0xff]
      %v824 = vld [vmem:[%s229 + $0x1f0] sm:$0xff]
      %v825 = vld [vmem:[%s229 + $0x1f8] sm:$0xff]
      %v826 = vld [vmem:[%s229 + $0x200] sm:$0xff]
      %v827 = vld [vmem:[%s229 + $0x208] sm:$0xff]
      %v828 = vld [vmem:[%s229 + $0x210] sm:$0xff]
      %v829 = vld [vmem:[%s229 + $0x218] sm:$0xff]
      %v830 = vld [vmem:[%s229 + $0x220] sm:$0xff]
      %v831 = vld [vmem:[%s229 + $0x228] sm:$0xff]
      %v832 = vld [vmem:[%s229 + $0x230] sm:$0xff]
      %v833 = vld [vmem:[%s229 + $0x238] sm:$0xff]
      %v834 = vld [vmem:[%s229 + $0x240] sm:$0xff]
      %v835 = vld [vmem:[%s229 + $0x248] sm:$0xff]
      %v836 = vld [vmem:[%s229 + $0x250] sm:$0xff]
      %v837 = vld [vmem:[%s229 + $0x258] sm:$0xff]
      %v838 = vld [vmem:[%s229 + $0x260] sm:$0xff]
      %v839 = vld [vmem:[%s229 + $0x268] sm:$0xff]
      %v840 = vld [vmem:[%s229 + $0x270] sm:$0xff]
      %v841 = vld [vmem:[%s229 + $0x278] sm:$0xff]
      %v842 = vld [vmem:[%s229 + $0x280] sm:$0xff]
      %v843 = vld [vmem:[%s229 + $0x288] sm:$0xff]
      %v844 = vld [vmem:[%s229 + $0x290] sm:$0xff]
      %v845 = vld [vmem:[%s229 + $0x298] sm:$0xff]
      %v846 = vld [vmem:[%s229 + $0x2a0] sm:$0xff]
      %v847 = vld [vmem:[%s229 + $0x2a8] sm:$0xff]
      %v848 = vld [vmem:[%s229 + $0x2b0] sm:$0xff]
      %v849 = vld [vmem:[%s229 + $0x2b8] sm:$0xff]
      %v850 = vld [vmem:[%s229 + $0x2c0] sm:$0xff]
      %v851 = vld [vmem:[%s229 + $0x2c8] sm:$0xff]
      %v852 = vld [vmem:[%s229 + $0x2d0] sm:$0xff]
      %v853 = vld [vmem:[%s229 + $0x2d8] sm:$0xff]
      %v854 = vld [vmem:[%s229 + $0x2e0] sm:$0xff]
      %v855 = vld [vmem:[%s229 + $0x2e8] sm:$0xff]
      %v856 = vld [vmem:[%s229 + $0x2f0] sm:$0xff]
      %v857 = vld [vmem:[%s229 + $0x2f8] sm:$0xff]
      %v858 = vld [vmem:[%s229 + $0x300] sm:$0xff]
      %v859 = vld [vmem:[%s229 + $0x308] sm:$0xff]
      %v860 = vld [vmem:[%s229 + $0x310] sm:$0xff]
      %v861 = vld [vmem:[%s229 + $0x318] sm:$0xff]
      %v862 = vld [vmem:[%s229 + $0x320] sm:$0xff]
      %v863 = vld [vmem:[%s229 + $0x328] sm:$0xff]
      %v864 = vld [vmem:[%s229 + $0x330] sm:$0xff]
      %v865 = vld [vmem:[%s229 + $0x338] sm:$0xff]
      %v866 = vld [vmem:[%s229 + $0x340] sm:$0xff]
      %v867 = vld [vmem:[%s229 + $0x348] sm:$0xff]
      %v868 = vld [vmem:[%s229 + $0x350] sm:$0xff]
      %v869 = vld [vmem:[%s229 + $0x358] sm:$0xff]
      %v870 = vld [vmem:[%s229 + $0x360] sm:$0xff]
      %v871 = vld [vmem:[%s229 + $0x368] sm:$0xff]
      %v872 = vld [vmem:[%s229 + $0x370] sm:$0xff]
      %v873 = vld [vmem:[%s229 + $0x378] sm:$0xff]
      %v874 = vld [vmem:[%s229 + $0x380] sm:$0xff]
      %v875 = vld [vmem:[%s229 + $0x388] sm:$0xff]
      %v876 = vld [vmem:[%s229 + $0x390] sm:$0xff]
      %v877 = vld [vmem:[%s229 + $0x398] sm:$0xff]
      %v878 = vld [vmem:[%s229 + $0x3a0] sm:$0xff]
      %v879 = vld [vmem:[%s229 + $0x3a8] sm:$0xff]
      %v880 = vld [vmem:[%s229 + $0x3b0] sm:$0xff]
      %v881 = vld [vmem:[%s229 + $0x3b8] sm:$0xff]
      %v882 = vld [vmem:[%s229 + $0x3c0] sm:$0xff]
      %v883 = vld [vmem:[%s229 + $0x3c8] sm:$0xff]
      %v884 = vld [vmem:[%s229 + $0x3d0] sm:$0xff]
      %v885 = vld [vmem:[%s229 + $0x3d8] sm:$0xff]
      %v886 = vld [vmem:[%s229 + $0x3e0] sm:$0xff]
      %v887 = vld [vmem:[%s229 + $0x3e8] sm:$0xff]
      %v888 = vld [vmem:[%s229 + $0x3f0] sm:$0xff]
      %v889 = vld [vmem:[%s229 + $0x3f8] sm:$0xff]
      %890 = vmatprep.subr.mxu0 %v507
      %891 = vmatpush1.msra.mxu0 %v506
      %892 = vmatprep.subr.mxu0 %v509
      %893 = vmatpush1.msra.mxu0 %v508
      %894 = vmatprep.subr.mxu0 %v511
      %895 = vmatpush1.msra.mxu0 %v510
      %896 = vmatprep.subr.mxu0 %v513
      %897 = vmatpush1.msra.mxu0 %v512
      %898 = vmatprep.subr.mxu0 %v515
      %899 = vmatpush1.msra.mxu0 %v514
      %900 = vmatprep.subr.mxu0 %v517
      %901 = vmatpush1.msra.mxu0 %v516
      %902 = vmatprep.subr.mxu0 %v519
      %903 = vmatpush1.msra.mxu0 %v518
      %904 = vmatprep.subr.mxu0 %v521
      %905 = vmatpush1.msra.mxu0 %v520
      %906 = vmatprep.subr.mxu0 %v523
      %907 = vmatpush1.msra.mxu0 %v522
      %908 = vmatprep.subr.mxu0 %v525
      %909 = vmatpush1.msra.mxu0 %v524
      %910 = vmatprep.subr.mxu0 %v527
      %911 = vmatpush1.msra.mxu0 %v526
      %912 = vmatprep.subr.mxu0 %v529
      %913 = vmatpush1.msra.mxu0 %v528
      %914 = vmatprep.subr.mxu0 %v531
      %915 = vmatpush1.msra.mxu0 %v530
      %916 = vmatprep.subr.mxu0 %v533
      %917 = vmatpush1.msra.mxu0 %v532
      %918 = vmatprep.subr.mxu0 %v535
      %919 = vmatpush1.msra.mxu0 %v534
      %920 = vmatprep.subr.mxu0 %v537
      %921 = vmatpush1.msra.mxu0 %v536
      %922 = vmatprep.subr.mxu0 %v539
      %923 = vmatpush1.msra.mxu0 %v538
      %924 = vmatprep.subr.mxu0 %v541
      %925 = vmatpush1.msra.mxu0 %v540
      %926 = vmatprep.subr.mxu0 %v543
      %927 = vmatpush1.msra.mxu0 %v542
      %928 = vmatprep.subr.mxu0 %v545
      %929 = vmatpush1.msra.mxu0 %v544
      %930 = vmatprep.subr.mxu0 %v547
      %931 = vmatpush1.msra.mxu0 %v546
      %932 = vmatprep.subr.mxu0 %v549
      %933 = vmatpush1.msra.mxu0 %v548
      %934 = vmatprep.subr.mxu0 %v551
      %935 = vmatpush1.msra.mxu0 %v550
      %936 = vmatprep.subr.mxu0 %v553
      %937 = vmatpush1.msra.mxu0 %v552
      %938 = vmatprep.subr.mxu0 %v555
      %939 = vmatpush1.msra.mxu0 %v554
      %940 = vmatprep.subr.mxu0 %v557
      %941 = vmatpush1.msra.mxu0 %v556
      %942 = vmatprep.subr.mxu0 %v559
      %943 = vmatpush1.msra.mxu0 %v558
      %944 = vmatprep.subr.mxu0 %v561
      %945 = vmatpush1.msra.mxu0 %v560
      %946 = vmatprep.subr.mxu0 %v563
      %947 = vmatpush1.msra.mxu0 %v562
      %948 = vmatprep.subr.mxu0 %v565
      %949 = vmatpush1.msra.mxu0 %v564
      %950 = vmatprep.subr.mxu0 %v567
      %951 = vmatpush1.msra.mxu0 %v566
      %952 = vmatprep.subr.mxu0 %v569
      %953 = vmatpush1.msra.mxu0 %v568
      %954 = vmatprep.mubr.f32.mxu0 %v763
      %955 = vmatmul.mubr.f32.gmra.mrb[0].mxu0 %v762
      %v956 = vpop.f32.mrb[0].mxu0
      %v957 = vadd.f32 0.0, %v956
      %v958 = vpop.f32.mrb[0].mxu0
      %v959 = vadd.f32 0.0, %v958
      %960 = vmatprep.mubr.f32.mxu0 %v771
      %961 = vmatmul.mubr.f32.gmra.mrb[0].mxu0 %v770
      %v962 = vpop.f32.mrb[0].mxu0
      %v963 = vadd.f32 0.0, %v962
      %v964 = vpop.f32.mrb[0].mxu0
      %v965 = vadd.f32 0.0, %v964
      %966 = vmatprep.mubr.f32.mxu0 %v779
      %967 = vmatmul.mubr.f32.gmra.mrb[0].mxu0 %v778
      %v968 = vpop.f32.mrb[0].mxu0
      %v969 = vadd.f32 0.0, %v968
      %v970 = vpop.f32.mrb[0].mxu0
      %v971 = vadd.f32 0.0, %v970
      %972 = vmatprep.mubr.f32.mxu0 %v787
      %973 = vmatmul.mubr.f32.gmra.mrb[0].mxu0 %v786
      %v974 = vpop.f32.mrb[0].mxu0
      %v975 = vadd.f32 0.0, %v974
      %v976 = vpop.f32.mrb[0].mxu0
      %v977 = vadd.f32 0.0, %v976
      %978 = vmatprep.mubr.f32.mxu0 %v795
      %979 = vmatmul.mubr.f32.gmra.mrb[0].mxu0 %v794
      %v980 = vpop.f32.mrb[0].mxu0
      %v981 = vadd.f32 0.0, %v980
      %v982 = vpop.f32.mrb[0].mxu0
      %v983 = vadd.f32 0.0, %v982
      %984 = vmatprep.mubr.f32.mxu0 %v803
      %985 = vmatmul.mubr.f32.gmra.mrb[0].mxu0 %v802
      %v986 = vpop.f32.mrb[0].mxu0
      %v987 = vadd.f32 0.0, %v986
      %v988 = vpop.f32.mrb[0].mxu0
      %v989 = vadd.f32 0.0, %v988
      %990 = vmatprep.mubr.f32.mxu0 %v811
      %991 = vmatmul.mubr.f32.gmra.mrb[0].mxu0 %v810
      %v992 = vpop.f32.mrb[0].mxu0
      %v993 = vadd.f32 0.0, %v992
      %v994 = vpop.f32.mrb[0].mxu0
      %v995 = vadd.f32 0.0, %v994
      %996 = vmatprep.mubr.f32.mxu0 %v819
      %997 = vmatmul.mubr.f32.gmra.mrb[0].mxu0 %v818
      %v998 = vpop.f32.mrb[0].mxu0
      %v999 = vadd.f32 0.0, %v998
      %v1000 = vpop.f32.mrb[0].mxu0
      %v1001 = vadd.f32 0.0, %v1000
      %1002 = vmatprep.mubr.f32.mxu0 %v827
      %1003 = vmatmul.mubr.f32.gmra.mrb[0].mxu0 %v826
      %v1004 = vpop.f32.mrb[0].mxu0
      %v1005 = vadd.f32 0.0, %v1004
      %v1006 = vpop.f32.mrb[0].mxu0
      %v1007 = vadd.f32 0.0, %v1006
      %1008 = vmatprep.mubr.f32.mxu0 %v835
      %1009 = vmatmul.mubr.f32.gmra.mrb[0].mxu0 %v834
      %v1010 = vpop.f32.mrb[0].mxu0
      %v1011 = vadd.f32 0.0, %v1010
      %v1012 = vpop.f32.mrb[0].mxu0
      %v1013 = vadd.f32 0.0, %v1012
      %1014 = vmatprep.mubr.f32.mxu0 %v843
      %1015 = vmatmul.mubr.f32.gmra.mrb[0].mxu0 %v842
      %v1016 = vpop.f32.mrb[0].mxu0
      %v1017 = vadd.f32 0.0, %v1016
      %v1018 = vpop.f32.mrb[0].mxu0
      %v1019 = vadd.f32 0.0, %v1018
      %1020 = vmatprep.mubr.f32.mxu0 %v851
      %1021 = vmatmul.mubr.f32.gmra.mrb[0].mxu0 %v850
      %v1022 = vpop.f32.mrb[0].mxu0
      %v1023 = vadd.f32 0.0, %v1022
      %v1024 = vpop.f32.mrb[0].mxu0
      %v1025 = vadd.f32 0.0, %v1024
      %1026 = vmatprep.mubr.f32.mxu0 %v859
      %1027 = vmatmul.mubr.f32.gmra.mrb[0].mxu0 %v858
      %v1028 = vpop.f32.mrb[0].mxu0
      %v1029 = vadd.f32 0.0, %v1028
      %v1030 = vpop.f32.mrb[0].mxu0
      %v1031 = vadd.f32 0.0, %v1030
      %1032 = vmatprep.mubr.f32.mxu0 %v867
      %1033 = vmatmul.mubr.f32.gmra.mrb[0].mxu0 %v866
      %v1034 = vpop.f32.mrb[0].mxu0
      %v1035 = vadd.f32 0.0, %v1034
      %v1036 = vpop.f32.mrb[0].mxu0
      %v1037 = vadd.f32 0.0, %v1036
      %1038 = vmatprep.mubr.f32.mxu0 %v875
      %1039 = vmatmul.mubr.f32.gmra.mrb[0].mxu0 %v874
      %v1040 = vpop.f32.mrb[0].mxu0
      %v1041 = vadd.f32 0.0, %v1040
      %v1042 = vpop.f32.mrb[0].mxu0
      %v1043 = vadd.f32 0.0, %v1042
      %1044 = vmatprep.mubr.f32.mxu0 %v883
      %1045 = vmatmul.mubr.f32.gmra.mrb[0].mxu0 %v882
      %v1046 = vpop.f32.mrb[0].mxu0
      %v1047 = vadd.f32 0.0, %v1046
      %v1048 = vpop.f32.mrb[0].mxu0
      %v1049 = vadd.f32 0.0, %v1048
      %1050 = vdwg.mxu0
      %1051 = vmatprep.subr.mxu0 %v571
      %1052 = vmatpush1.msra.mxu0 %v570
      %1053 = vmatprep.subr.mxu0 %v573
      %1054 = vmatpush1.msra.mxu0 %v572
      %1055 = vmatprep.subr.mxu0 %v575
      %1056 = vmatpush1.msra.mxu0 %v574
      %1057 = vmatprep.subr.mxu0 %v577
      %1058 = vmatpush1.msra.mxu0 %v576
      %1059 = vmatprep.subr.mxu0 %v579
      %1060 = vmatpush1.msra.mxu0 %v578
      %1061 = vmatprep.subr.mxu0 %v581
      %1062 = vmatpush1.msra.mxu0 %v580
      %1063 = vmatprep.subr.mxu0 %v583
      %1064 = vmatpush1.msra.mxu0 %v582
      %1065 = vmatprep.subr.mxu0 %v585
      %1066 = vmatpush1.msra.mxu0 %v584
      %1067 = vmatprep.subr.mxu0 %v587
      %1068 = vmatpush1.msra.mxu0 %v586
      %1069 = vmatprep.subr.mxu0 %v589
      %1070 = vmatpush1.msra.mxu0 %v588
      %1071 = vmatprep.subr.mxu0 %v591
      %1072 = vmatpush1.msra.mxu0 %v590
      %1073 = vmatprep.subr.mxu0 %v593
      %1074 = vmatpush1.msra.mxu0 %v592
      %1075 = vmatprep.subr.mxu0 %v595
      %1076 = vmatpush1.msra.mxu0 %v594
      %1077 = vmatprep.subr.mxu0 %v597
      %1078 = vmatpush1.msra.mxu0 %v596
      %1079 = vmatprep.subr.mxu0 %v599
      %1080 = vmatpush1.msra.mxu0 %v598
      %1081 = vmatprep.subr.mxu0 %v601
      %1082 = vmatpush1.msra.mxu0 %v600
      %1083 = vmatprep.subr.mxu0 %v603
      %1084 = vmatpush1.msra.mxu0 %v602
      %1085 = vmatprep.subr.mxu0 %v605
      %1086 = vmatpush1.msra.mxu0 %v604
      %1087 = vmatprep.subr.mxu0 %v607
      %1088 = vmatpush1.msra.mxu0 %v606
      %1089 = vmatprep.subr.mxu0 %v609
      %1090 = vmatpush1.msra.mxu0 %v608
      %1091 = vmatprep.subr.mxu0 %v611
      %1092 = vmatpush1.msra.mxu0 %v610
      %1093 = vmatprep.subr.mxu0 %v613
      %1094 = vmatpush1.msra.mxu0 %v612
      %1095 = vmatprep.subr.mxu0 %v615
      %1096 = vmatpush1.msra.mxu0 %v614
      %1097 = vmatprep.subr.mxu0 %v617
      %1098 = vmatpush1.msra.mxu0 %v616
      %1099 = vmatprep.subr.mxu0 %v619
      %1100 = vmatpush1.msra.mxu0 %v618
      %1101 = vmatprep.subr.mxu0 %v621
      %1102 = vmatpush1.msra.mxu0 %v620
      %1103 = vmatprep.subr.mxu0 %v623
      %1104 = vmatpush1.msra.mxu0 %v622
      %1105 = vmatprep.subr.mxu0 %v625
      %1106 = vmatpush1.msra.mxu0 %v624
      %1107 = vmatprep.subr.mxu0 %v627
      %1108 = vmatpush1.msra.mxu0 %v626
      %1109 = vmatprep.subr.mxu0 %v629
      %1110 = vmatpush1.msra.mxu0 %v628
      %1111 = vmatprep.subr.mxu0 %v631
      %1112 = vmatpush1.msra.mxu0 %v630
      %1113 = vmatprep.subr.mxu0 %v633
      %1114 = vmatpush1.msra.mxu0 %v632
      %1115 = vmatprep.mubr.f32.mxu0 %v765
      %1116 = vmatmul.mubr.f32.gmra.mrb[0].mxu0 %v764
      %v1117 = vpop.f32.mrb[0].mxu0
      %v1118 = vadd.f32 %v957, %v1117
      %v1119 = vpop.f32.mrb[0].mxu0
      %v1120 = vadd.f32 %v959, %v1119
      %1121 = vmatprep.mubr.f32.mxu0 %v773
      %1122 = vmatmul.mubr.f32.gmra.mrb[0].mxu0 %v772
      %v1123 = vpop.f32.mrb[0].mxu0
      %v1124 = vadd.f32 %v963, %v1123
      %v1125 = vpop.f32.mrb[0].mxu0
      %v1126 = vadd.f32 %v965, %v1125
      %1127 = vmatprep.mubr.f32.mxu0 %v781
      %1128 = vmatmul.mubr.f32.gmra.mrb[0].mxu0 %v780
      %v1129 = vpop.f32.mrb[0].mxu0
      %v1130 = vadd.f32 %v969, %v1129
      %v1131 = vpop.f32.mrb[0].mxu0
      %v1132 = vadd.f32 %v971, %v1131
      %1133 = vmatprep.mubr.f32.mxu0 %v789
      %1134 = vmatmul.mubr.f32.gmra.mrb[0].mxu0 %v788
      %v1135 = vpop.f32.mrb[0].mxu0
      %v1136 = vadd.f32 %v975, %v1135
      %v1137 = vpop.f32.mrb[0].mxu0
      %v1138 = vadd.f32 %v977, %v1137
      %1139 = vmatprep.mubr.f32.mxu0 %v797
      %1140 = vmatmul.mubr.f32.gmra.mrb[0].mxu0 %v796
      %v1141 = vpop.f32.mrb[0].mxu0
      %v1142 = vadd.f32 %v981, %v1141
      %v1143 = vpop.f32.mrb[0].mxu0
      %v1144 = vadd.f32 %v983, %v1143
      %1145 = vmatprep.mubr.f32.mxu0 %v805
      %1146 = vmatmul.mubr.f32.gmra.mrb[0].mxu0 %v804
      %v1147 = vpop.f32.mrb[0].mxu0
      %v1148 = vadd.f32 %v987, %v1147
      %v1149 = vpop.f32.mrb[0].mxu0
      %v1150 = vadd.f32 %v989, %v1149
      %1151 = vmatprep.mubr.f32.mxu0 %v813
      %1152 = vmatmul.mubr.f32.gmra.mrb[0].mxu0 %v812
      %v1153 = vpop.f32.mrb[0].mxu0
      %v1154 = vadd.f32 %v993, %v1153
      %v1155 = vpop.f32.mrb[0].mxu0
      %v1156 = vadd.f32 %v995, %v1155
      %1157 = vmatprep.mubr.f32.mxu0 %v821
      %1158 = vmatmul.mubr.f32.gmra.mrb[0].mxu0 %v820
      %v1159 = vpop.f32.mrb[0].mxu0
      %v1160 = vadd.f32 %v999, %v1159
      %v1161 = vpop.f32.mrb[0].mxu0
      %v1162 = vadd.f32 %v1001, %v1161
      %1163 = vmatprep.mubr.f32.mxu0 %v829
      %1164 = vmatmul.mubr.f32.gmra.mrb[0].mxu0 %v828
      %v1165 = vpop.f32.mrb[0].mxu0
      %v1166 = vadd.f32 %v1005, %v1165
      %v1167 = vpop.f32.mrb[0].mxu0
      %v1168 = vadd.f32 %v1007, %v1167
      %1169 = vmatprep.mubr.f32.mxu0 %v837
      %1170 = vmatmul.mubr.f32.gmra.mrb[0].mxu0 %v836
      %v1171 = vpop.f32.mrb[0].mxu0
      %v1172 = vadd.f32 %v1011, %v1171
      %v1173 = vpop.f32.mrb[0].mxu0
      %v1174 = vadd.f32 %v1013, %v1173
      %1175 = vmatprep.mubr.f32.mxu0 %v845
      %1176 = vmatmul.mubr.f32.gmra.mrb[0].mxu0 %v844
      %v1177 = vpop.f32.mrb[0].mxu0
      %v1178 = vadd.f32 %v1017, %v1177
      %v1179 = vpop.f32.mrb[0].mxu0
      %v1180 = vadd.f32 %v1019, %v1179
      %1181 = vmatprep.mubr.f32.mxu0 %v853
      %1182 = vmatmul.mubr.f32.gmra.mrb[0].mxu0 %v852
      %v1183 = vpop.f32.mrb[0].mxu0
      %v1184 = vadd.f32 %v1023, %v1183
      %v1185 = vpop.f32.mrb[0].mxu0
      %v1186 = vadd.f32 %v1025, %v1185
      %1187 = vmatprep.mubr.f32.mxu0 %v861
      %1188 = vmatmul.mubr.f32.gmra.mrb[0].mxu0 %v860
      %v1189 = vpop.f32.mrb[0].mxu0
      %v1190 = vadd.f32 %v1029, %v1189
      %v1191 = vpop.f32.mrb[0].mxu0
      %v1192 = vadd.f32 %v1031, %v1191
      %1193 = vmatprep.mubr.f32.mxu0 %v869
      %1194 = vmatmul.mubr.f32.gmra.mrb[0].mxu0 %v868
      %v1195 = vpop.f32.mrb[0].mxu0
      %v1196 = vadd.f32 %v1035, %v1195
      %v1197 = vpop.f32.mrb[0].mxu0
      %v1198 = vadd.f32 %v1037, %v1197
      %1199 = vmatprep.mubr.f32.mxu0 %v877
      %1200 = vmatmul.mubr.f32.gmra.mrb[0].mxu0 %v876
      %v1201 = vpop.f32.mrb[0].mxu0
      %v1202 = vadd.f32 %v1041, %v1201
      %v1203 = vpop.f32.mrb[0].mxu0
      %v1204 = vadd.f32 %v1043, %v1203
      %1205 = vmatprep.mubr.f32.mxu0 %v885
      %1206 = vmatmul.mubr.f32.gmra.mrb[0].mxu0 %v884
      %v1207 = vpop.f32.mrb[0].mxu0
      %v1208 = vadd.f32 %v1047, %v1207
      %v1209 = vpop.f32.mrb[0].mxu0
      %v1210 = vadd.f32 %v1049, %v1209
      %1211 = vdwg.mxu0
      %1212 = vmatprep.subr.mxu0 %v635
      %1213 = vmatpush1.msra.mxu0 %v634
      %1214 = vmatprep.subr.mxu0 %v637
      %1215 = vmatpush1.msra.mxu0 %v636
      %1216 = vmatprep.subr.mxu0 %v639
      %1217 = vmatpush1.msra.mxu0 %v638
      %1218 = vmatprep.subr.mxu0 %v641
      %1219 = vmatpush1.msra.mxu0 %v640
      %1220 = vmatprep.subr.mxu0 %v643
      %1221 = vmatpush1.msra.mxu0 %v642
      %1222 = vmatprep.subr.mxu0 %v645
      %1223 = vmatpush1.msra.mxu0 %v644
      %1224 = vmatprep.subr.mxu0 %v647
      %1225 = vmatpush1.msra.mxu0 %v646
      %1226 = vmatprep.subr.mxu0 %v649
      %1227 = vmatpush1.msra.mxu0 %v648
      %1228 = vmatprep.subr.mxu0 %v651
      %1229 = vmatpush1.msra.mxu0 %v650
      %1230 = vmatprep.subr.mxu0 %v653
      %1231 = vmatpush1.msra.mxu0 %v652
      %1232 = vmatprep.subr.mxu0 %v655
      %1233 = vmatpush1.msra.mxu0 %v654
      %1234 = vmatprep.subr.mxu0 %v657
      %1235 = vmatpush1.msra.mxu0 %v656
      %1236 = vmatprep.subr.mxu0 %v659
      %1237 = vmatpush1.msra.mxu0 %v658
      %1238 = vmatprep.subr.mxu0 %v661
      %1239 = vmatpush1.msra.mxu0 %v660
      %1240 = vmatprep.subr.mxu0 %v663
      %1241 = vmatpush1.msra.mxu0 %v662
      %1242 = vmatprep.subr.mxu0 %v665
      %1243 = vmatpush1.msra.mxu0 %v664
      %1244 = vmatprep.subr.mxu0 %v667
      %1245 = vmatpush1.msra.mxu0 %v666
      %1246 = vmatprep.subr.mxu0 %v669
      %1247 = vmatpush1.msra.mxu0 %v668
      %1248 = vmatprep.subr.mxu0 %v671
      %1249 = vmatpush1.msra.mxu0 %v670
      %1250 = vmatprep.subr.mxu0 %v673
      %1251 = vmatpush1.msra.mxu0 %v672
      %1252 = vmatprep.subr.mxu0 %v675
      %1253 = vmatpush1.msra.mxu0 %v674
      %1254 = vmatprep.subr.mxu0 %v677
      %1255 = vmatpush1.msra.mxu0 %v676
      %1256 = vmatprep.subr.mxu0 %v679
      %1257 = vmatpush1.msra.mxu0 %v678
      %1258 = vmatprep.subr.mxu0 %v681
      %1259 = vmatpush1.msra.mxu0 %v680
      %1260 = vmatprep.subr.mxu0 %v683
      %1261 = vmatpush1.msra.mxu0 %v682
      %1262 = vmatprep.subr.mxu0 %v685
      %1263 = vmatpush1.msra.mxu0 %v684
      %1264 = vmatprep.subr.mxu0 %v687
      %1265 = vmatpush1.msra.mxu0 %v686
      %1266 = vmatprep.subr.mxu0 %v689
      %1267 = vmatpush1.msra.mxu0 %v688
      %1268 = vmatprep.subr.mxu0 %v691
      %1269 = vmatpush1.msra.mxu0 %v690
      %1270 = vmatprep.subr.mxu0 %v693
      %1271 = vmatpush1.msra.mxu0 %v692
      %1272 = vmatprep.subr.mxu0 %v695
      %1273 = vmatpush1.msra.mxu0 %v694
      %1274 = vmatprep.subr.mxu0 %v697
      %1275 = vmatpush1.msra.mxu0 %v696
      %1276 = vmatprep.mubr.f32.mxu0 %v767
      %1277 = vmatmul.mubr.f32.gmra.mrb[0].mxu0 %v766
      %v1278 = vpop.f32.mrb[0].mxu0
      %v1279 = vadd.f32 %v1118, %v1278
      %v1280 = vpop.f32.mrb[0].mxu0
      %v1281 = vadd.f32 %v1120, %v1280
      %1282 = vmatprep.mubr.f32.mxu0 %v775
      %1283 = vmatmul.mubr.f32.gmra.mrb[0].mxu0 %v774
      %v1284 = vpop.f32.mrb[0].mxu0
      %v1285 = vadd.f32 %v1124, %v1284
      %v1286 = vpop.f32.mrb[0].mxu0
      %v1287 = vadd.f32 %v1126, %v1286
      %1288 = vmatprep.mubr.f32.mxu0 %v783
      %1289 = vmatmul.mubr.f32.gmra.mrb[0].mxu0 %v782
      %v1290 = vpop.f32.mrb[0].mxu0
      %v1291 = vadd.f32 %v1130, %v1290
      %v1292 = vpop.f32.mrb[0].mxu0
      %v1293 = vadd.f32 %v1132, %v1292
      %1294 = vmatprep.mubr.f32.mxu0 %v791
      %1295 = vmatmul.mubr.f32.gmra.mrb[0].mxu0 %v790
      %v1296 = vpop.f32.mrb[0].mxu0
      %v1297 = vadd.f32 %v1136, %v1296
      %v1298 = vpop.f32.mrb[0].mxu0
      %v1299 = vadd.f32 %v1138, %v1298
      %1300 = vmatprep.mubr.f32.mxu0 %v799
      %1301 = vmatmul.mubr.f32.gmra.mrb[0].mxu0 %v798
      %v1302 = vpop.f32.mrb[0].mxu0
      %v1303 = vadd.f32 %v1142, %v1302
      %v1304 = vpop.f32.mrb[0].mxu0
      %v1305 = vadd.f32 %v1144, %v1304
      %1306 = vmatprep.mubr.f32.mxu0 %v807
      %1307 = vmatmul.mubr.f32.gmra.mrb[0].mxu0 %v806
      %v1308 = vpop.f32.mrb[0].mxu0
      %v1309 = vadd.f32 %v1148, %v1308
      %v1310 = vpop.f32.mrb[0].mxu0
      %v1311 = vadd.f32 %v1150, %v1310
      %1312 = vmatprep.mubr.f32.mxu0 %v815
      %1313 = vmatmul.mubr.f32.gmra.mrb[0].mxu0 %v814
      %v1314 = vpop.f32.mrb[0].mxu0
      %v1315 = vadd.f32 %v1154, %v1314
      %v1316 = vpop.f32.mrb[0].mxu0
      %v1317 = vadd.f32 %v1156, %v1316
      %1318 = vmatprep.mubr.f32.mxu0 %v823
      %1319 = vmatmul.mubr.f32.gmra.mrb[0].mxu0 %v822
      %v1320 = vpop.f32.mrb[0].mxu0
      %v1321 = vadd.f32 %v1160, %v1320
      %v1322 = vpop.f32.mrb[0].mxu0
      %v1323 = vadd.f32 %v1162, %v1322
      %1324 = vmatprep.mubr.f32.mxu0 %v831
      %1325 = vmatmul.mubr.f32.gmra.mrb[0].mxu0 %v830
      %v1326 = vpop.f32.mrb[0].mxu0
      %v1327 = vadd.f32 %v1166, %v1326
      %v1328 = vpop.f32.mrb[0].mxu0
      %v1329 = vadd.f32 %v1168, %v1328
      %1330 = vmatprep.mubr.f32.mxu0 %v839
      %1331 = vmatmul.mubr.f32.gmra.mrb[0].mxu0 %v838
      %v1332 = vpop.f32.mrb[0].mxu0
      %v1333 = vadd.f32 %v1172, %v1332
      %v1334 = vpop.f32.mrb[0].mxu0
      %v1335 = vadd.f32 %v1174, %v1334
      %1336 = vmatprep.mubr.f32.mxu0 %v847
      %1337 = vmatmul.mubr.f32.gmra.mrb[0].mxu0 %v846
      %v1338 = vpop.f32.mrb[0].mxu0
      %v1339 = vadd.f32 %v1178, %v1338
      %v1340 = vpop.f32.mrb[0].mxu0
      %v1341 = vadd.f32 %v1180, %v1340
      %1342 = vmatprep.mubr.f32.mxu0 %v855
      %1343 = vmatmul.mubr.f32.gmra.mrb[0].mxu0 %v854
      %v1344 = vpop.f32.mrb[0].mxu0
      %v1345 = vadd.f32 %v1184, %v1344
      %v1346 = vpop.f32.mrb[0].mxu0
      %v1347 = vadd.f32 %v1186, %v1346
      %1348 = vmatprep.mubr.f32.mxu0 %v863
      %1349 = vmatmul.mubr.f32.gmra.mrb[0].mxu0 %v862
      %v1350 = vpop.f32.mrb[0].mxu0
      %v1351 = vadd.f32 %v1190, %v1350
      %v1352 = vpop.f32.mrb[0].mxu0
      %v1353 = vadd.f32 %v1192, %v1352
      %1354 = vmatprep.mubr.f32.mxu0 %v871
      %1355 = vmatmul.mubr.f32.gmra.mrb[0].mxu0 %v870
      %v1356 = vpop.f32.mrb[0].mxu0
      %v1357 = vadd.f32 %v1196, %v1356
      %v1358 = vpop.f32.mrb[0].mxu0
      %v1359 = vadd.f32 %v1198, %v1358
      %1360 = vmatprep.mubr.f32.mxu0 %v879
      %1361 = vmatmul.mubr.f32.gmra.mrb[0].mxu0 %v878
      %v1362 = vpop.f32.mrb[0].mxu0
      %v1363 = vadd.f32 %v1202, %v1362
      %v1364 = vpop.f32.mrb[0].mxu0
      %v1365 = vadd.f32 %v1204, %v1364
      %1366 = vmatprep.mubr.f32.mxu0 %v887
      %1367 = vmatmul.mubr.f32.gmra.mrb[0].mxu0 %v886
      %v1368 = vpop.f32.mrb[0].mxu0
      %v1369 = vadd.f32 %v1208, %v1368
      %v1370 = vpop.f32.mrb[0].mxu0
      %v1371 = vadd.f32 %v1210, %v1370
      %1372 = vdwg.mxu0
      %1373 = vmatprep.subr.mxu0 %v699
      %1374 = vmatpush1.msra.mxu0 %v698
      %1375 = vmatprep.subr.mxu0 %v701
      %1376 = vmatpush1.msra.mxu0 %v700
      %1377 = vmatprep.subr.mxu0 %v703
      %1378 = vmatpush1.msra.mxu0 %v702
      %1379 = vmatprep.subr.mxu0 %v705
      %1380 = vmatpush1.msra.mxu0 %v704
      %1381 = vmatprep.subr.mxu0 %v707
      %1382 = vmatpush1.msra.mxu0 %v706
      %1383 = vmatprep.subr.mxu0 %v709
      %1384 = vmatpush1.msra.mxu0 %v708
      %1385 = vmatprep.subr.mxu0 %v711
      %1386 = vmatpush1.msra.mxu0 %v710
      %1387 = vmatprep.subr.mxu0 %v713
      %1388 = vmatpush1.msra.mxu0 %v712
      %1389 = vmatprep.subr.mxu0 %v715
      %1390 = vmatpush1.msra.mxu0 %v714
      %1391 = vmatprep.subr.mxu0 %v717
      %1392 = vmatpush1.msra.mxu0 %v716
      %1393 = vmatprep.subr.mxu0 %v719
      %1394 = vmatpush1.msra.mxu0 %v718
      %1395 = vmatprep.subr.mxu0 %v721
      %1396 = vmatpush1.msra.mxu0 %v720
      %1397 = vmatprep.subr.mxu0 %v723
      %1398 = vmatpush1.msra.mxu0 %v722
      %1399 = vmatprep.subr.mxu0 %v725
      %1400 = vmatpush1.msra.mxu0 %v724
      %1401 = vmatprep.subr.mxu0 %v727
      %1402 = vmatpush1.msra.mxu0 %v726
      %1403 = vmatprep.subr.mxu0 %v729
      %1404 = vmatpush1.msra.mxu0 %v728
      %1405 = vmatprep.subr.mxu0 %v731
      %1406 = vmatpush1.msra.mxu0 %v730
      %1407 = vmatprep.subr.mxu0 %v733
      %1408 = vmatpush1.msra.mxu0 %v732
      %1409 = vmatprep.subr.mxu0 %v735
      %1410 = vmatpush1.msra.mxu0 %v734
      %1411 = vmatprep.subr.mxu0 %v737
      %1412 = vmatpush1.msra.mxu0 %v736
      %1413 = vmatprep.subr.mxu0 %v739
      %1414 = vmatpush1.msra.mxu0 %v738
      %1415 = vmatprep.subr.mxu0 %v741
      %1416 = vmatpush1.msra.mxu0 %v740
      %1417 = vmatprep.subr.mxu0 %v743
      %1418 = vmatpush1.msra.mxu0 %v742
      %1419 = vmatprep.subr.mxu0 %v745
      %1420 = vmatpush1.msra.mxu0 %v744
      %1421 = vmatprep.subr.mxu0 %v747
      %1422 = vmatpush1.msra.mxu0 %v746
      %1423 = vmatprep.subr.mxu0 %v749
      %1424 = vmatpush1.msra.mxu0 %v748
      %1425 = vmatprep.subr.mxu0 %v751
      %1426 = vmatpush1.msra.mxu0 %v750
      %1427 = vmatprep.subr.mxu0 %v753
      %1428 = vmatpush1.msra.mxu0 %v752
      %1429 = vmatprep.subr.mxu0 %v755
      %1430 = vmatpush1.msra.mxu0 %v754
      %1431 = vmatprep.subr.mxu0 %v757
      %1432 = vmatpush1.msra.mxu0 %v756
      %1433 = vmatprep.subr.mxu0 %v759
      %1434 = vmatpush1.msra.mxu0 %v758
      %1435 = vmatprep.subr.mxu0 %v761
      %1436 = vmatpush1.msra.mxu0 %v760
      %1437 = vmatprep.mubr.f32.mxu0 %v769
      %1438 = vmatmul.mubr.f32.gmra.mrb[0].mxu0 %v768
      %v1439 = vpop.f32.mrb[0].mxu0
      %v1440 = vadd.f32 %v1279, %v1439
      %v1441 = vpop.f32.mrb[0].mxu0
      %v1442 = vadd.f32 %v1281, %v1441
      %1443 = vmatprep.mubr.f32.mxu0 %v777
      %1444 = vmatmul.mubr.f32.gmra.mrb[0].mxu0 %v776
      %v1445 = vpop.f32.mrb[0].mxu0
      %v1446 = vadd.f32 %v1285, %v1445
      %v1447 = vpop.f32.mrb[0].mxu0
      %v1448 = vadd.f32 %v1287, %v1447
      %1449 = vmatprep.mubr.f32.mxu0 %v785
      %1450 = vmatmul.mubr.f32.gmra.mrb[0].mxu0 %v784
      %v1451 = vpop.f32.mrb[0].mxu0
      %v1452 = vadd.f32 %v1291, %v1451
      %v1453 = vpop.f32.mrb[0].mxu0
      %v1454 = vadd.f32 %v1293, %v1453
      %1455 = vmatprep.mubr.f32.mxu0 %v793
      %1456 = vmatmul.mubr.f32.gmra.mrb[0].mxu0 %v792
      %v1457 = vpop.f32.mrb[0].mxu0
      %v1458 = vadd.f32 %v1297, %v1457
      %v1459 = vpop.f32.mrb[0].mxu0
      %v1460 = vadd.f32 %v1299, %v1459
      %1461 = vmatprep.mubr.f32.mxu0 %v801
      %1462 = vmatmul.mubr.f32.gmra.mrb[0].mxu0 %v800
      %v1463 = vpop.f32.mrb[0].mxu0
      %v1464 = vadd.f32 %v1303, %v1463
      %v1465 = vpop.f32.mrb[0].mxu0
      %v1466 = vadd.f32 %v1305, %v1465
      %1467 = vmatprep.mubr.f32.mxu0 %v809
      %1468 = vmatmul.mubr.f32.gmra.mrb[0].mxu0 %v808
      %v1469 = vpop.f32.mrb[0].mxu0
      %v1470 = vadd.f32 %v1309, %v1469
      %v1471 = vpop.f32.mrb[0].mxu0
      %v1472 = vadd.f32 %v1311, %v1471
      %1473 = vmatprep.mubr.f32.mxu0 %v817
      %1474 = vmatmul.mubr.f32.gmra.mrb[0].mxu0 %v816
      %v1475 = vpop.f32.mrb[0].mxu0
      %v1476 = vadd.f32 %v1315, %v1475
      %v1477 = vpop.f32.mrb[0].mxu0
      %v1478 = vadd.f32 %v1317, %v1477
      %1479 = vmatprep.mubr.f32.mxu0 %v825
      %1480 = vmatmul.mubr.f32.gmra.mrb[0].mxu0 %v824
      %v1481 = vpop.f32.mrb[0].mxu0
      %v1482 = vadd.f32 %v1321, %v1481
      %v1483 = vpop.f32.mrb[0].mxu0
      %v1484 = vadd.f32 %v1323, %v1483
      %1485 = vmatprep.mubr.f32.mxu0 %v833
      %1486 = vmatmul.mubr.f32.gmra.mrb[0].mxu0 %v832
      %v1487 = vpop.f32.mrb[0].mxu0
      %v1488 = vadd.f32 %v1327, %v1487
      %v1489 = vpop.f32.mrb[0].mxu0
      %v1490 = vadd.f32 %v1329, %v1489
      %1491 = vmatprep.mubr.f32.mxu0 %v841
      %1492 = vmatmul.mubr.f32.gmra.mrb[0].mxu0 %v840
      %v1493 = vpop.f32.mrb[0].mxu0
      %v1494 = vadd.f32 %v1333, %v1493
      %v1495 = vpop.f32.mrb[0].mxu0
      %v1496 = vadd.f32 %v1335, %v1495
      %1497 = vmatprep.mubr.f32.mxu0 %v849
      %1498 = vmatmul.mubr.f32.gmra.mrb[0].mxu0 %v848
      %v1499 = vpop.f32.mrb[0].mxu0
      %v1500 = vadd.f32 %v1339, %v1499
      %v1501 = vpop.f32.mrb[0].mxu0
      %v1502 = vadd.f32 %v1341, %v1501
      %1503 = vmatprep.mubr.f32.mxu0 %v857
      %1504 = vmatmul.mubr.f32.gmra.mrb[0].mxu0 %v856
      %v1505 = vpop.f32.mrb[0].mxu0
      %v1506 = vadd.f32 %v1345, %v1505
      %v1507 = vpop.f32.mrb[0].mxu0
      %v1508 = vadd.f32 %v1347, %v1507
      %1509 = vmatprep.mubr.f32.mxu0 %v865
      %1510 = vmatmul.mubr.f32.gmra.mrb[0].mxu0 %v864
      %v1511 = vpop.f32.mrb[0].mxu0
      %v1512 = vadd.f32 %v1351, %v1511
      %v1513 = vpop.f32.mrb[0].mxu0
      %v1514 = vadd.f32 %v1353, %v1513
      %1515 = vmatprep.mubr.f32.mxu0 %v873
      %1516 = vmatmul.mubr.f32.gmra.mrb[0].mxu0 %v872
      %v1517 = vpop.f32.mrb[0].mxu0
      %v1518 = vadd.f32 %v1357, %v1517
      %v1519 = vpop.f32.mrb[0].mxu0
      %v1520 = vadd.f32 %v1359, %v1519
      %1521 = vmatprep.mubr.f32.mxu0 %v881
      %1522 = vmatmul.mubr.f32.gmra.mrb[0].mxu0 %v880
      %v1523 = vpop.f32.mrb[0].mxu0
      %v1524 = vadd.f32 %v1363, %v1523
      %v1525 = vpop.f32.mrb[0].mxu0
      %v1526 = vadd.f32 %v1365, %v1525
      %1527 = vmatprep.mubr.f32.mxu0 %v889
      %1528 = vmatmul.mubr.f32.gmra.mrb[0].mxu0 %v888
      %v1529 = vpop.f32.mrb[0].mxu0
      %v1530 = vadd.f32 %v1369, %v1529
      %v1531 = vpop.f32.mrb[0].mxu0
      %v1532 = vadd.f32 %v1371, %v1531
      %1533 = vdwg.mxu0
      %vm1534 = vcmask 556032
      %v1535 = vsel %vm1534, %v1442, 0.0
      %v1536 = vadd.f32 %v1440, %v1535
      %1537 = vadd.xlane.f32.xlu0 %v1536
      %v1538 = vpop.xlane.xlu0 %1537
      %v1539 = vsel %vm1534, %v1448, 0.0
      %v1540 = vadd.f32 %v1446, %v1539
      %1541 = vadd.xlane.f32.xlu0 %v1540
      %v1542 = vpop.xlane.xlu0 %1541
      %v1543 = vsel %vm1534, %v1454, 0.0
      %v1544 = vadd.f32 %v1452, %v1543
      %1545 = vadd.xlane.f32.xlu0 %v1544
      %v1546 = vpop.xlane.xlu0 %1545
      %v1547 = vsel %vm1534, %v1460, 0.0
      %v1548 = vadd.f32 %v1458, %v1547
      %1549 = vadd.xlane.f32.xlu0 %v1548
      %v1550 = vpop.xlane.xlu0 %1549
      %v1551 = vsel %vm1534, %v1466, 0.0
      %v1552 = vadd.f32 %v1464, %v1551
      %1553 = vadd.xlane.f32.xlu0 %v1552
      %v1554 = vpop.xlane.xlu0 %1553
      %v1555 = vsel %vm1534, %v1472, 0.0
      %v1556 = vadd.f32 %v1470, %v1555
      %1557 = vadd.xlane.f32.xlu0 %v1556
      %v1558 = vpop.xlane.xlu0 %1557
      %v1559 = vsel %vm1534, %v1478, 0.0
      %v1560 = vadd.f32 %v1476, %v1559
      %1561 = vadd.xlane.f32.xlu0 %v1560
      %v1562 = vpop.xlane.xlu0 %1561
      %v1563 = vsel %vm1534, %v1484, 0.0
      %v1564 = vadd.f32 %v1482, %v1563
      %1565 = vadd.xlane.f32.xlu0 %v1564
      %v1566 = vpop.xlane.xlu0 %1565
      %v1567 = vsel %vm1534, %v1490, 0.0
      %v1568 = vadd.f32 %v1488, %v1567
      %1569 = vadd.xlane.f32.xlu0 %v1568
      %v1570 = vpop.xlane.xlu0 %1569
      %v1571 = vsel %vm1534, %v1496, 0.0
      %v1572 = vadd.f32 %v1494, %v1571
      %1573 = vadd.xlane.f32.xlu0 %v1572
      %v1574 = vpop.xlane.xlu0 %1573
      %v1575 = vsel %vm1534, %v1502, 0.0
      %v1576 = vadd.f32 %v1500, %v1575
      %1577 = vadd.xlane.f32.xlu0 %v1576
      %v1578 = vpop.xlane.xlu0 %1577
      %v1579 = vsel %vm1534, %v1508, 0.0
      %v1580 = vadd.f32 %v1506, %v1579
      %1581 = vadd.xlane.f32.xlu0 %v1580
      %v1582 = vpop.xlane.xlu0 %1581
      %v1583 = vsel %vm1534, %v1514, 0.0
      %v1584 = vadd.f32 %v1512, %v1583
      %1585 = vadd.xlane.f32.xlu0 %v1584
      %v1586 = vpop.xlane.xlu0 %1585
      %v1587 = vsel %vm1534, %v1520, 0.0
      %v1588 = vadd.f32 %v1518, %v1587
      %1589 = vadd.xlane.f32.xlu0 %v1588
      %v1590 = vpop.xlane.xlu0 %1589
      %v1591 = vsel %vm1534, %v1526, 0.0
      %v1592 = vadd.f32 %v1524, %v1591
      %1593 = vadd.xlane.f32.xlu0 %v1592
      %v1594 = vpop.xlane.xlu0 %1593
      %v1595 = vsel %vm1534, %v1532, 0.0
      %v1596 = vadd.f32 %v1530, %v1595
      %1597 = vadd.xlane.f32.xlu0 %v1596
      %v1598 = vpop.xlane.xlu0 %1597
      %v1599 = vmul.f32 %v1440, %v1440
      %v1600 = vmul.f32 %v1442, %v1442
      %v1601 = vmul.f32 %v1446, %v1446
      %v1602 = vmul.f32 %v1448, %v1448
      %v1603 = vmul.f32 %v1452, %v1452
      %v1604 = vmul.f32 %v1454, %v1454
      %v1605 = vmul.f32 %v1458, %v1458
      %v1606 = vmul.f32 %v1460, %v1460
      %v1607 = vmul.f32 %v1464, %v1464
      %v1608 = vmul.f32 %v1466, %v1466
      %v1609 = vmul.f32 %v1470, %v1470
      %v1610 = vmul.f32 %v1472, %v1472
      %v1611 = vmul.f32 %v1476, %v1476
      %v1612 = vmul.f32 %v1478, %v1478
      %v1613 = vmul.f32 %v1482, %v1482
      %v1614 = vmul.f32 %v1484, %v1484
      %v1615 = vmul.f32 %v1488, %v1488
      %v1616 = vmul.f32 %v1490, %v1490
      %v1617 = vmul.f32 %v1494, %v1494
      %v1618 = vmul.f32 %v1496, %v1496
      %v1619 = vmul.f32 %v1500, %v1500
      %v1620 = vmul.f32 %v1502, %v1502
      %v1621 = vmul.f32 %v1506, %v1506
      %v1622 = vmul.f32 %v1508, %v1508
      %v1623 = vmul.f32 %v1512, %v1512
      %v1624 = vmul.f32 %v1514, %v1514
      %v1625 = vmul.f32 %v1518, %v1518
      %v1626 = vmul.f32 %v1520, %v1520
      %v1627 = vmul.f32 %v1524, %v1524
      %v1628 = vmul.f32 %v1526, %v1526
      %v1629 = vmul.f32 %v1530, %v1530
      %v1630 = vmul.f32 %v1532, %v1532
      %v1631 = vsel %vm1534, %v1600, 0.0
      %v1632 = vadd.f32 %v1599, %v1631
      %1633 = vadd.xlane.f32.xlu0 %v1632
      %v1634 = vpop.xlane.xlu0 %1633
      %v1635 = vsel %vm1534, %v1602, 0.0
      %v1636 = vadd.f32 %v1601, %v1635
      %1637 = vadd.xlane.f32.xlu0 %v1636
      %v1638 = vpop.xlane.xlu0 %1637
      %v1639 = vsel %vm1534, %v1604, 0.0
      %v1640 = vadd.f32 %v1603, %v1639
      %1641 = vadd.xlane.f32.xlu0 %v1640
      %v1642 = vpop.xlane.xlu0 %1641
      %v1643 = vsel %vm1534, %v1606, 0.0
      %v1644 = vadd.f32 %v1605, %v1643
      %1645 = vadd.xlane.f32.xlu0 %v1644
      %v1646 = vpop.xlane.xlu0 %1645
      %v1647 = vsel %vm1534, %v1608, 0.0
      %v1648 = vadd.f32 %v1607, %v1647
      %1649 = vadd.xlane.f32.xlu0 %v1648
      %v1650 = vpop.xlane.xlu0 %1649
      %v1651 = vsel %vm1534, %v1610, 0.0
      %v1652 = vadd.f32 %v1609, %v1651
      %1653 = vadd.xlane.f32.xlu0 %v1652
      %v1654 = vpop.xlane.xlu0 %1653
      %v1655 = vsel %vm1534, %v1612, 0.0
      %v1656 = vadd.f32 %v1611, %v1655
      %1657 = vadd.xlane.f32.xlu0 %v1656
      %v1658 = vpop.xlane.xlu0 %1657
      %v1659 = vsel %vm1534, %v1614, 0.0
      %v1660 = vadd.f32 %v1613, %v1659
      %1661 = vadd.xlane.f32.xlu0 %v1660
      %v1662 = vpop.xlane.xlu0 %1661
      %v1663 = vsel %vm1534, %v1616, 0.0
      %v1664 = vadd.f32 %v1615, %v1663
      %1665 = vadd.xlane.f32.xlu0 %v1664
      %v1666 = vpop.xlane.xlu0 %1665
      %v1667 = vsel %vm1534, %v1618, 0.0
      %v1668 = vadd.f32 %v1617, %v1667
      %1669 = vadd.xlane.f32.xlu0 %v1668
      %v1670 = vpop.xlane.xlu0 %1669
      %v1671 = vsel %vm1534, %v1620, 0.0
      %v1672 = vadd.f32 %v1619, %v1671
      %1673 = vadd.xlane.f32.xlu0 %v1672
      %v1674 = vpop.xlane.xlu0 %1673
      %v1675 = vsel %vm1534, %v1622, 0.0
      %v1676 = vadd.f32 %v1621, %v1675
      %1677 = vadd.xlane.f32.xlu0 %v1676
      %v1678 = vpop.xlane.xlu0 %1677
      %v1679 = vsel %vm1534, %v1624, 0.0
      %v1680 = vadd.f32 %v1623, %v1679
      %1681 = vadd.xlane.f32.xlu0 %v1680
      %v1682 = vpop.xlane.xlu0 %1681
      %v1683 = vsel %vm1534, %v1626, 0.0
      %v1684 = vadd.f32 %v1625, %v1683
      %1685 = vadd.xlane.f32.xlu0 %v1684
      %v1686 = vpop.xlane.xlu0 %1685
      %v1687 = vsel %vm1534, %v1628, 0.0
      %v1688 = vadd.f32 %v1627, %v1687
      %1689 = vadd.xlane.f32.xlu0 %v1688
      %v1690 = vpop.xlane.xlu0 %1689
      %v1691 = vsel %vm1534, %v1630, 0.0
      %v1692 = vadd.f32 %v1629, %v1691
      %1693 = vadd.xlane.f32.xlu0 %v1692
      %v1694 = vpop.xlane.xlu0 %1693
      %v1695 = vmul.f32 %v1538, 0.0051020407
      %v1696 = vmul.f32 %v1542, 0.0051020407
      %v1697 = vmul.f32 %v1546, 0.0051020407
      %v1698 = vmul.f32 %v1550, 0.0051020407
      %v1699 = vmul.f32 %v1554, 0.0051020407
      %v1700 = vmul.f32 %v1558, 0.0051020407
      %v1701 = vmul.f32 %v1562, 0.0051020407
      %v1702 = vmul.f32 %v1566, 0.0051020407
      %v1703 = vmul.f32 %v1570, 0.0051020407
      %v1704 = vmul.f32 %v1574, 0.0051020407
      %v1705 = vmul.f32 %v1578, 0.0051020407
      %v1706 = vmul.f32 %v1582, 0.0051020407
      %v1707 = vmul.f32 %v1586, 0.0051020407
      %v1708 = vmul.f32 %v1590, 0.0051020407
      %v1709 = vmul.f32 %v1594, 0.0051020407
      %v1710 = vmul.f32 %v1598, 0.0051020407
      %v1711 = vmul.f32 %v1634, 0.0051020407
      %v1712 = vmul.f32 %v1638, 0.0051020407
      %v1713 = vmul.f32 %v1642, 0.0051020407
      %v1714 = vmul.f32 %v1646, 0.0051020407
      %v1715 = vmul.f32 %v1650, 0.0051020407
      %v1716 = vmul.f32 %v1654, 0.0051020407
      %v1717 = vmul.f32 %v1658, 0.0051020407
      %v1718 = vmul.f32 %v1662, 0.0051020407
      %v1719 = vmul.f32 %v1666, 0.0051020407
      %v1720 = vmul.f32 %v1670, 0.0051020407
      %v1721 = vmul.f32 %v1674, 0.0051020407
      %v1722 = vmul.f32 %v1678, 0.0051020407
      %v1723 = vmul.f32 %v1682, 0.0051020407
      %v1724 = vmul.f32 %v1686, 0.0051020407
      %v1725 = vmul.f32 %v1690, 0.0051020407
      %v1726 = vmul.f32 %v1694, 0.0051020407
      %v1727 = vmul.f32 %v1695, %v1695
      %v1728 = vmul.f32 %v1696, %v1696
      %v1729 = vmul.f32 %v1697, %v1697
      %v1730 = vmul.f32 %v1698, %v1698
      %v1731 = vmul.f32 %v1699, %v1699
      %v1732 = vmul.f32 %v1700, %v1700
      %v1733 = vmul.f32 %v1701, %v1701
      %v1734 = vmul.f32 %v1702, %v1702
      %v1735 = vmul.f32 %v1703, %v1703
      %v1736 = vmul.f32 %v1704, %v1704
      %v1737 = vmul.f32 %v1705, %v1705
      %v1738 = vmul.f32 %v1706, %v1706
      %v1739 = vmul.f32 %v1707, %v1707
      %v1740 = vmul.f32 %v1708, %v1708
      %v1741 = vmul.f32 %v1709, %v1709
      %v1742 = vmul.f32 %v1710, %v1710
      %v1743 = vsub.f32 %v1711, %v1727
      %v1744 = vsub.f32 %v1712, %v1728
      %v1745 = vsub.f32 %v1713, %v1729
      %v1746 = vsub.f32 %v1714, %v1730
      %v1747 = vsub.f32 %v1715, %v1731
      %v1748 = vsub.f32 %v1716, %v1732
      %v1749 = vsub.f32 %v1717, %v1733
      %v1750 = vsub.f32 %v1718, %v1734
      %v1751 = vsub.f32 %v1719, %v1735
      %v1752 = vsub.f32 %v1720, %v1736
      %v1753 = vsub.f32 %v1721, %v1737
      %v1754 = vsub.f32 %v1722, %v1738
      %v1755 = vsub.f32 %v1723, %v1739
      %v1756 = vsub.f32 %v1724, %v1740
      %v1757 = vsub.f32 %v1725, %v1741
      %v1758 = vsub.f32 %v1726, %v1742
      %v1759 = vadd.f32 %v1743, 1e-05
      %v1760 = vadd.f32 %v1744, 1e-05
      %v1761 = vadd.f32 %v1745, 1e-05
      %v1762 = vadd.f32 %v1746, 1e-05
      %v1763 = vadd.f32 %v1747, 1e-05
      %v1764 = vadd.f32 %v1748, 1e-05
      %v1765 = vadd.f32 %v1749, 1e-05
      %v1766 = vadd.f32 %v1750, 1e-05
      %v1767 = vadd.f32 %v1751, 1e-05
      %v1768 = vadd.f32 %v1752, 1e-05
      %v1769 = vadd.f32 %v1753, 1e-05
      %v1770 = vadd.f32 %v1754, 1e-05
      %v1771 = vadd.f32 %v1755, 1e-05
      %v1772 = vadd.f32 %v1756, 1e-05
      %v1773 = vadd.f32 %v1757, 1e-05
      %v1774 = vadd.f32 %v1758, 1e-05
      %v1775 = vrsqrt.pop %v1759
      %v1776 = vrsqrt.pop %v1760
      %v1777 = vrsqrt.pop %v1761
      %v1778 = vrsqrt.pop %v1762
      %v1779 = vrsqrt.pop %v1763
      %v1780 = vrsqrt.pop %v1764
      %v1781 = vrsqrt.pop %v1765
      %v1782 = vrsqrt.pop %v1766
      %v1783 = vrsqrt.pop %v1767
      %v1784 = vrsqrt.pop %v1768
      %v1785 = vrsqrt.pop %v1769
      %v1786 = vrsqrt.pop %v1770
      %v1787 = vrsqrt.pop %v1771
      %v1788 = vrsqrt.pop %v1772
      %v1789 = vrsqrt.pop %v1773
      %v1790 = vrsqrt.pop %v1774
      %v1791 = vld [vmem:[%s235] sm:$0xff]
      %v1792 = vld [vmem:[%s235 + $0x8] sm:$0xff]
      %v1793 = vld [vmem:[%s235 + $0x10] sm:$0xff]
      %v1794 = vld [vmem:[%s235 + $0x18] sm:$0xff]
      %v1795 = vld [vmem:[%s235 + $0x20] sm:$0xff]
      %v1796 = vld [vmem:[%s235 + $0x28] sm:$0xff]
      %v1797 = vld [vmem:[%s235 + $0x30] sm:$0xff]
      %v1798 = vld [vmem:[%s235 + $0x38] sm:$0xff]
      %v1799 = vld [vmem:[%s235 + $0x40] sm:$0xff]
      %v1800 = vld [vmem:[%s235 + $0x48] sm:$0xff]
      %v1801 = vld [vmem:[%s235 + $0x50] sm:$0xff]
      %v1802 = vld [vmem:[%s235 + $0x58] sm:$0xff]
      %v1803 = vld [vmem:[%s235 + $0x60] sm:$0xff]
      %v1804 = vld [vmem:[%s235 + $0x68] sm:$0xff]
      %v1805 = vld [vmem:[%s235 + $0x70] sm:$0xff]
      %v1806 = vld [vmem:[%s235 + $0x78] sm:$0xff]
      %v1807 = vmul.f32 %v1791, %v1775
      %v1808 = vmul.f32 %v1792, %v1776
      %v1809 = vmul.f32 %v1793, %v1777
      %v1810 = vmul.f32 %v1794, %v1778
      %v1811 = vmul.f32 %v1795, %v1779
      %v1812 = vmul.f32 %v1796, %v1780
      %v1813 = vmul.f32 %v1797, %v1781
      %v1814 = vmul.f32 %v1798, %v1782
      %v1815 = vmul.f32 %v1799, %v1783
      %v1816 = vmul.f32 %v1800, %v1784
      %v1817 = vmul.f32 %v1801, %v1785
      %v1818 = vmul.f32 %v1802, %v1786
      %v1819 = vmul.f32 %v1803, %v1787
      %v1820 = vmul.f32 %v1804, %v1788
      %v1821 = vmul.f32 %v1805, %v1789
      %v1822 = vmul.f32 %v1806, %v1790
      %v1823 = vld [vmem:[%s241] sm:$0xff]
      %v1824 = vld [vmem:[%s241 + $0x8] sm:$0xff]
      %v1825 = vld [vmem:[%s241 + $0x10] sm:$0xff]
      %v1826 = vld [vmem:[%s241 + $0x18] sm:$0xff]
      %v1827 = vld [vmem:[%s241 + $0x20] sm:$0xff]
      %v1828 = vld [vmem:[%s241 + $0x28] sm:$0xff]
      %v1829 = vld [vmem:[%s241 + $0x30] sm:$0xff]
      %v1830 = vld [vmem:[%s241 + $0x38] sm:$0xff]
      %v1831 = vld [vmem:[%s241 + $0x40] sm:$0xff]
      %v1832 = vld [vmem:[%s241 + $0x48] sm:$0xff]
      %v1833 = vld [vmem:[%s241 + $0x50] sm:$0xff]
      %v1834 = vld [vmem:[%s241 + $0x58] sm:$0xff]
      %v1835 = vld [vmem:[%s241 + $0x60] sm:$0xff]
      %v1836 = vld [vmem:[%s241 + $0x68] sm:$0xff]
      %v1837 = vld [vmem:[%s241 + $0x70] sm:$0xff]
      %v1838 = vld [vmem:[%s241 + $0x78] sm:$0xff]
      %v1839 = vmul.f32 %v1695, %v1807
      %v1840 = vmul.f32 %v1696, %v1808
      %v1841 = vmul.f32 %v1697, %v1809
      %v1842 = vmul.f32 %v1698, %v1810
      %v1843 = vmul.f32 %v1699, %v1811
      %v1844 = vmul.f32 %v1700, %v1812
      %v1845 = vmul.f32 %v1701, %v1813
      %v1846 = vmul.f32 %v1702, %v1814
      %v1847 = vmul.f32 %v1703, %v1815
      %v1848 = vmul.f32 %v1704, %v1816
      %v1849 = vmul.f32 %v1705, %v1817
      %v1850 = vmul.f32 %v1706, %v1818
      %v1851 = vmul.f32 %v1707, %v1819
      %v1852 = vmul.f32 %v1708, %v1820
      %v1853 = vmul.f32 %v1709, %v1821
      %v1854 = vmul.f32 %v1710, %v1822
      %v1855 = vsub.f32 %v1823, %v1839
      %v1856 = vsub.f32 %v1824, %v1840
      %v1857 = vsub.f32 %v1825, %v1841
      %v1858 = vsub.f32 %v1826, %v1842
      %v1859 = vsub.f32 %v1827, %v1843
      %v1860 = vsub.f32 %v1828, %v1844
      %v1861 = vsub.f32 %v1829, %v1845
      %v1862 = vsub.f32 %v1830, %v1846
      %v1863 = vsub.f32 %v1831, %v1847
      %v1864 = vsub.f32 %v1832, %v1848
      %v1865 = vsub.f32 %v1833, %v1849
      %v1866 = vsub.f32 %v1834, %v1850
      %v1867 = vsub.f32 %v1835, %v1851
      %v1868 = vsub.f32 %v1836, %v1852
      %v1869 = vsub.f32 %v1837, %v1853
      %v1870 = vsub.f32 %v1838, %v1854
      %1872 = vset.pattern.permute.xlu0 0
      %1873 = vperm.xlu0 %1872, %v1807
      %v1874 = vpop.permute.xlu0 %1873
      %1877 = vset.pattern.permute.xlu0 0
      %1878 = vperm.xlu0 %1877, %v1808
      %v1879 = vpop.permute.xlu0 %1878
      %1882 = vset.pattern.permute.xlu0 0
      %1883 = vperm.xlu0 %1882, %v1809
      %v1884 = vpop.permute.xlu0 %1883
      %1887 = vset.pattern.permute.xlu0 0
      %1888 = vperm.xlu0 %1887, %v1810
      %v1889 = vpop.permute.xlu0 %1888
      %1892 = vset.pattern.permute.xlu0 0
      %1893 = vperm.xlu0 %1892, %v1811
      %v1894 = vpop.permute.xlu0 %1893
      %1897 = vset.pattern.permute.xlu0 0
      %1898 = vperm.xlu0 %1897, %v1812
      %v1899 = vpop.permute.xlu0 %1898
      %1902 = vset.pattern.permute.xlu0 0
      %1903 = vperm.xlu0 %1902, %v1813
      %v1904 = vpop.permute.xlu0 %1903
      %1907 = vset.pattern.permute.xlu0 0
      %1908 = vperm.xlu0 %1907, %v1814
      %v1909 = vpop.permute.xlu0 %1908
      %1912 = vset.pattern.permute.xlu0 0
      %1913 = vperm.xlu0 %1912, %v1815
      %v1914 = vpop.permute.xlu0 %1913
      %1917 = vset.pattern.permute.xlu0 0
      %1918 = vperm.xlu0 %1917, %v1816
      %v1919 = vpop.permute.xlu0 %1918
      %1922 = vset.pattern.permute.xlu0 0
      %1923 = vperm.xlu0 %1922, %v1817
      %v1924 = vpop.permute.xlu0 %1923
      %1927 = vset.pattern.permute.xlu0 0
      %1928 = vperm.xlu0 %1927, %v1818
      %v1929 = vpop.permute.xlu0 %1928
      %1932 = vset.pattern.permute.xlu0 0
      %1933 = vperm.xlu0 %1932, %v1819
      %v1934 = vpop.permute.xlu0 %1933
      %1937 = vset.pattern.permute.xlu0 0
      %1938 = vperm.xlu0 %1937, %v1820
      %v1939 = vpop.permute.xlu0 %1938
      %1942 = vset.pattern.permute.xlu0 0
      %1943 = vperm.xlu0 %1942, %v1821
      %v1944 = vpop.permute.xlu0 %1943
      %1947 = vset.pattern.permute.xlu0 0
      %1948 = vperm.xlu0 %1947, %v1822
      %v1949 = vpop.permute.xlu0 %1948
      %v1951 = vmul.f32 %v1440, %v1874
      %v1952 = vmul.f32 %v1442, %v1874
      %v1953 = vmul.f32 %v1446, %v1879
      %v1954 = vmul.f32 %v1448, %v1879
      %v1955 = vmul.f32 %v1452, %v1884
      %v1956 = vmul.f32 %v1454, %v1884
      %v1957 = vmul.f32 %v1458, %v1889
      %v1958 = vmul.f32 %v1460, %v1889
      %v1959 = vmul.f32 %v1464, %v1894
      %v1960 = vmul.f32 %v1466, %v1894
      %v1961 = vmul.f32 %v1470, %v1899
      %v1962 = vmul.f32 %v1472, %v1899
      %v1963 = vmul.f32 %v1476, %v1904
      %v1964 = vmul.f32 %v1478, %v1904
      %v1965 = vmul.f32 %v1482, %v1909
      %v1966 = vmul.f32 %v1484, %v1909
      %v1967 = vmul.f32 %v1488, %v1914
      %v1968 = vmul.f32 %v1490, %v1914
      %v1969 = vmul.f32 %v1494, %v1919
      %v1970 = vmul.f32 %v1496, %v1919
      %v1971 = vmul.f32 %v1500, %v1924
      %v1972 = vmul.f32 %v1502, %v1924
      %v1973 = vmul.f32 %v1506, %v1929
      %v1974 = vmul.f32 %v1508, %v1929
      %v1975 = vmul.f32 %v1512, %v1934
      %v1976 = vmul.f32 %v1514, %v1934
      %v1977 = vmul.f32 %v1518, %v1939
      %v1978 = vmul.f32 %v1520, %v1939
      %v1979 = vmul.f32 %v1524, %v1944
      %v1980 = vmul.f32 %v1526, %v1944
      %v1981 = vmul.f32 %v1530, %v1949
      %v1982 = vmul.f32 %v1532, %v1949
      %1984 = vset.pattern.permute.xlu0 0
      %1985 = vperm.xlu0 %1984, %v1855
      %v1986 = vpop.permute.xlu0 %1985
      %1989 = vset.pattern.permute.xlu0 0
      %1990 = vperm.xlu0 %1989, %v1856
      %v1991 = vpop.permute.xlu0 %1990
      %1994 = vset.pattern.permute.xlu0 0
      %1995 = vperm.xlu0 %1994, %v1857
      %v1996 = vpop.permute.xlu0 %1995
      %1999 = vset.pattern.permute.xlu0 0
      %2000 = vperm.xlu0 %1999, %v1858
      %v2001 = vpop.permute.xlu0 %2000
      %2004 = vset.pattern.permute.xlu0 0
      %2005 = vperm.xlu0 %2004, %v1859
      %v2006 = vpop.permute.xlu0 %2005
      %2009 = vset.pattern.permute.xlu0 0
      %2010 = vperm.xlu0 %2009, %v1860
      %v2011 = vpop.permute.xlu0 %2010
      %2014 = vset.pattern.permute.xlu0 0
      %2015 = vperm.xlu0 %2014, %v1861
      %v2016 = vpop.permute.xlu0 %2015
      %2019 = vset.pattern.permute.xlu0 0
      %2020 = vperm.xlu0 %2019, %v1862
      %v2021 = vpop.permute.xlu0 %2020
      %2024 = vset.pattern.permute.xlu0 0
      %2025 = vperm.xlu0 %2024, %v1863
      %v2026 = vpop.permute.xlu0 %2025
      %2029 = vset.pattern.permute.xlu0 0
      %2030 = vperm.xlu0 %2029, %v1864
      %v2031 = vpop.permute.xlu0 %2030
      %2034 = vset.pattern.permute.xlu0 0
      %2035 = vperm.xlu0 %2034, %v1865
      %v2036 = vpop.permute.xlu0 %2035
      %2039 = vset.pattern.permute.xlu0 0
      %2040 = vperm.xlu0 %2039, %v1866
      %v2041 = vpop.permute.xlu0 %2040
      %2044 = vset.pattern.permute.xlu0 0
      %2045 = vperm.xlu0 %2044, %v1867
      %v2046 = vpop.permute.xlu0 %2045
      %2049 = vset.pattern.permute.xlu0 0
      %2050 = vperm.xlu0 %2049, %v1868
      %v2051 = vpop.permute.xlu0 %2050
      %2054 = vset.pattern.permute.xlu0 0
      %2055 = vperm.xlu0 %2054, %v1869
      %v2056 = vpop.permute.xlu0 %2055
      %2059 = vset.pattern.permute.xlu0 0
      %2060 = vperm.xlu0 %2059, %v1870
      %v2061 = vpop.permute.xlu0 %2060
      %v2063 = vadd.f32 %v1951, %v1986
      %v2064 = vadd.f32 %v1952, %v1986
      %v2065 = vadd.f32 %v1953, %v1991
      %v2066 = vadd.f32 %v1954, %v1991
      %v2067 = vadd.f32 %v1955, %v1996
      %v2068 = vadd.f32 %v1956, %v1996
      %v2069 = vadd.f32 %v1957, %v2001
      %v2070 = vadd.f32 %v1958, %v2001
      %v2071 = vadd.f32 %v1959, %v2006
      %v2072 = vadd.f32 %v1960, %v2006
      %v2073 = vadd.f32 %v1961, %v2011
      %v2074 = vadd.f32 %v1962, %v2011
      %v2075 = vadd.f32 %v1963, %v2016
      %v2076 = vadd.f32 %v1964, %v2016
      %v2077 = vadd.f32 %v1965, %v2021
      %v2078 = vadd.f32 %v1966, %v2021
      %v2079 = vadd.f32 %v1967, %v2026
      %v2080 = vadd.f32 %v1968, %v2026
      %v2081 = vadd.f32 %v1969, %v2031
      %v2082 = vadd.f32 %v1970, %v2031
      %v2083 = vadd.f32 %v1971, %v2036
      %v2084 = vadd.f32 %v1972, %v2036
      %v2085 = vadd.f32 %v1973, %v2041
      %v2086 = vadd.f32 %v1974, %v2041
      %v2087 = vadd.f32 %v1975, %v2046
      %v2088 = vadd.f32 %v1976, %v2046
      %v2089 = vadd.f32 %v1977, %v2051
      %v2090 = vadd.f32 %v1978, %v2051
      %v2091 = vadd.f32 %v1979, %v2056
      %v2092 = vadd.f32 %v1980, %v2056
      %v2093 = vadd.f32 %v1981, %v2061
      %v2094 = vadd.f32 %v1982, %v2061
      %2095 = vst [vmem:[%s248] sm:$0xff] %v2063
      %2096 = vst.msk [vmem:[%s248 + $0x8] sm:$0xff] %vm1534, %v2064
      %2097 = vst [vmem:[%s248 + $0x10] sm:$0xff] %v2065
      %2098 = vst.msk [vmem:[%s248 + $0x18] sm:$0xff] %vm1534, %v2066
      %2099 = vst [vmem:[%s248 + $0x20] sm:$0xff] %v2067
      %2100 = vst.msk [vmem:[%s248 + $0x28] sm:$0xff] %vm1534, %v2068
      %2101 = vst [vmem:[%s248 + $0x30] sm:$0xff] %v2069
      %2102 = vst.msk [vmem:[%s248 + $0x38] sm:$0xff] %vm1534, %v2070
      %2103 = vst [vmem:[%s248 + $0x40] sm:$0xff] %v2071
      %2104 = vst.msk [vmem:[%s248 + $0x48] sm:$0xff] %vm1534, %v2072
      %2105 = vst [vmem:[%s248 + $0x50] sm:$0xff] %v2073
      %2106 = vst.msk [vmem:[%s248 + $0x58] sm:$0xff] %vm1534, %v2074
      %2107 = vst [vmem:[%s248 + $0x60] sm:$0xff] %v2075
      %2108 = vst.msk [vmem:[%s248 + $0x68] sm:$0xff] %vm1534, %v2076
      %2109 = vst [vmem:[%s248 + $0x70] sm:$0xff] %v2077
      %2110 = vst.msk [vmem:[%s248 + $0x78] sm:$0xff] %vm1534, %v2078
      %2111 = vst [vmem:[%s248 + $0x80] sm:$0xff] %v2079
      %2112 = vst.msk [vmem:[%s248 + $0x88] sm:$0xff] %vm1534, %v2080
      %2113 = vst [vmem:[%s248 + $0x90] sm:$0xff] %v2081
      %2114 = vst.msk [vmem:[%s248 + $0x98] sm:$0xff] %vm1534, %v2082
      %2115 = vst [vmem:[%s248 + $0xa0] sm:$0xff] %v2083
      %2116 = vst.msk [vmem:[%s248 + $0xa8] sm:$0xff] %vm1534, %v2084
      %2117 = vst [vmem:[%s248 + $0xb0] sm:$0xff] %v2085
      %2118 = vst.msk [vmem:[%s248 + $0xb8] sm:$0xff] %vm1534, %v2086
      %2119 = vst [vmem:[%s248 + $0xc0] sm:$0xff] %v2087
      %2120 = vst.msk [vmem:[%s248 + $0xc8] sm:$0xff] %vm1534, %v2088
      %2121 = vst [vmem:[%s248 + $0xd0] sm:$0xff] %v2089
      %2122 = vst.msk [vmem:[%s248 + $0xd8] sm:$0xff] %vm1534, %v2090
      %2123 = vst [vmem:[%s248 + $0xe0] sm:$0xff] %v2091
      %2124 = vst.msk [vmem:[%s248 + $0xe8] sm:$0xff] %vm1534, %v2092
      %2125 = vst [vmem:[%s248 + $0xf0] sm:$0xff] %v2093
      %2126 = vst.msk [vmem:[%s248 + $0xf8] sm:$0xff] %vm1534, %v2094
      %s2127 = smul.u32 16, %s15
      %p2128 = scmp.lt.s32.totalorder %s2127, 31
      %s2129 = scalar_select %p2128, %s2127, 31
      %s2130 = smul.addr %s2129, 2
      %s2131 = smul.addr %s2130, 8
      %s2132 = scalar_lea.vmem %s4, %s2131
      // Predicated region
      $region37: #{tpu_custom_call.1} parent=35 // pred_check
        %p2133 = pneg %p132
      $region38: #{tpu_custom_call.1} parent=35 // pred_check_branch
        %2135 = sbr.rel (%p2133) target = $region40
      $region39: #{tpu_custom_call.1} parent=35 // pred_region
        %s2136 = smul.u32 16, %s15
      $region40: #{tpu_custom_call.1} parent=35 // pred_fallthru
        _
    $region36: #{tpu_custom_call.1} parent=5 // pred_fallthru
      _
    %p2137 = scmp.le.s32.totalorder 2, %s10
    // Predicated region
    $region41: #{tpu_custom_call.1} parent=5 // pred_check
      %p2138 = pneg %p2137
    $region42: #{tpu_custom_call.1} parent=5 // pred_check_branch
      %2140 = sbr.rel (%p2138) target = $region44
    $region43: #{tpu_custom_call.1} parent=5 // pred_region
      %s2141 = ssub.s32 %s10, 2
      // Predicated region
      $region45: #{tpu_custom_call.1} parent=43 // pred_check
        %p2142 = pneg %p138
      $region46: #{tpu_custom_call.1} parent=43 // pred_check_branch
        %2144 = sbr.rel (%p2142) target = $region48
      $region47: #{tpu_custom_call.1} parent=43 // pred_region
        %s2145 = smul.u32 16, %s16
        %p2146 = scmp.lt.s32.totalorder %s2145, 31
        %s2147 = scalar_select %p2146, %s2145, 31
        %s2148 = smul.addr %s2147, 2
        %s2149 = smul.addr %s2148, 8
        %s2150 = scalar_lea.vmem %s4, %s2149
      $region48: #{tpu_custom_call.1} parent=43 // pred_fallthru
        _
    $region44: #{tpu_custom_call.1} parent=5 // pred_fallthru
      _
  $region6: #{tpu_custom_call.1} parent=0 // loop_footer
    %s14 = sadd.s32 1, %s10
  $region7: #{tpu_custom_call.1} parent=0 // loop_footer_branch
    %9 = sbr.rel target = $region3
  $region8: #{tpu_custom_call.1} parent=0 // loop_exit
    _

</llo_original>
